<compile_context>
chip_gen: v5e
topology: v5e:2x2
jax: 0.10.0
libtpu: 0.0.40
codegen_flags: <defaults>
</compile_context>

<pallas_src>
import functools

import jax
import jax.numpy as jnp
from jax.experimental import pallas as pl
from jax.experimental.pallas import tpu as pltpu

INPUT_SIZE = 28 * 28            # 784
K_PAD = 896                     # 784 zero-padded up to 7 * 128
H1, H2, H3 = 512, 256, 128
NUM_CLASSES = 10                # TODO(synk): linear4 (128 -> 10) is unused in forward(); not materialized.


def _round_up(x, m):
    return (x + m - 1) // m * m


def simplefc_kernel(x_ref, w1_ref, b1_ref, w2_ref, b2_ref, w3_ref, b3_ref, o_ref):
    """Fused 3-layer MLP on one batch tile. Weights (bf16) stay VMEM-resident."""
    # Cast activations to bf16 only at the MXU boundary; accumulate in f32.
    x = x_ref[...].astype(jnp.bfloat16)

    h1 = jnp.dot(x, w1_ref[...], preferred_element_type=jnp.float32) + b1_ref[...]
    h1 = jnp.maximum(h1, 0.0)

    h2 = jnp.dot(h1.astype(jnp.bfloat16), w2_ref[...],
                 preferred_element_type=jnp.float32) + b2_ref[...]
    h2 = jnp.maximum(h2, 0.0)

    h3 = jnp.dot(h2.astype(jnp.bfloat16), w3_ref[...],
                 preferred_element_type=jnp.float32) + b3_ref[...]
    h3 = jnp.maximum(h3, 0.0)

    # Dropout with p=0.0 is the identity (train and eval); p>0 would use
    # pltpu.prng_seed / pltpu.prng_random_bits masking.
    o_ref[...] = h3.astype(o_ref.dtype)


@functools.partial(jax.jit, static_argnames=("tile_b",))
def simplefc_forward(x, params, *, tile_b=512):
    """x: [B, 784] f32 -> [B, 128] f32. params from prepare_params()."""
    w1, b1, w2, b2, w3, b3 = params
    B, K = x.shape

    # Zero-pad contraction dim 784 -> 896 (matches the zero-padded rows of w1).
    if K != K_PAD:
        x = jnp.pad(x, ((0, 0), (0, K_PAD - K)))

    # Batch tile: multiple of 8 (sublane), capped at tile_b; pad B up to a tile.
    tb = min(tile_b, _round_up(B, 8))
    b_pad = _round_up(B, tb)
    if b_pad != B:
        x = jnp.pad(x, ((0, b_pad - B), (0, 0)))

    grid = (b_pad // tb,)

    flops = 2 * b_pad * (K_PAD * H1 + H1 * H2 + H2 * H3)
    bytes_accessed = (
        b_pad * K_PAD * 4                                   # x (f32)
        + (K_PAD * H1 + H1 * H2 + H2 * H3) * 2              # weights (bf16)
        + (H1 + H2 + H3) * 4                                # biases (f32)
        + b_pad * H3 * 4                                    # output (f32)
    )

    out = pl.pallas_call(
        simplefc_kernel,
        out_shape=jax.ShapeDtypeStruct((b_pad, H3), jnp.float32),
        grid=grid,
        in_specs=[
            pl.BlockSpec((tb, K_PAD), lambda i: (i, 0)),    # x: tiled over batch
            pl.BlockSpec((K_PAD, H1), lambda i: (0, 0)),    # weights/biases: resident
            pl.BlockSpec((1, H1), lambda i: (0, 0)),
            pl.BlockSpec((H1, H2), lambda i: (0, 0)),
            pl.BlockSpec((1, H2), lambda i: (0, 0)),
            pl.BlockSpec((H2, H3), lambda i: (0, 0)),
            pl.BlockSpec((1, H3), lambda i: (0, 0)),
        ],
        out_specs=pl.BlockSpec((tb, H3), lambda i: (i, 0)),
        compiler_params=pltpu.CompilerParams(
            dimension_semantics=("parallel",),
        ),
        cost_estimate=pl.CostEstimate(
            flops=flops, transcendentals=0, bytes_accessed=bytes_accessed),
    )(x, w1, b1, w2, b2, w3, b3)

    return out[:B]


def init_params(key):
    """f32 params mimicking nn.Linear default init (U[-1/sqrt(fan_in), +])."""
    def linear_init(k, fan_in, fan_out):
        kw, kb = jax.random.split(k)
        bound = 1.0 / jnp.sqrt(jnp.float32(fan_in))
        w = jax.random.uniform(kw, (fan_in, fan_out), jnp.float32, -bound, bound)
        b = jax.random.uniform(kb, (1, fan_out), jnp.float32, -bound, bound)
        return w, b

    k1, k2, k3 = jax.random.split(key, 3)
    w1, b1 = linear_init(k1, INPUT_SIZE, H1)
    w2, b2 = linear_init(k2, H1, H2)
    w3, b3 = linear_init(k3, H2, H3)
    return (w1, b1, w2, b2, w3, b3)


def prepare_params(params):
    """Kernel-ready params: bf16 weights ([in, out]), w1 zero-padded to K_PAD rows."""
    w1, b1, w2, b2, w3, b3 = params
    w1p = jnp.pad(w1, ((0, K_PAD - w1.shape[0]), (0, 0))).astype(jnp.bfloat16)
    return (w1p, b1, w2.astype(jnp.bfloat16), b2, w3.astype(jnp.bfloat16), b3)


def reference_forward(x, prepared_params):
    """Pure-JAX reference matching the kernel's bf16-input / f32-accum numerics."""
    w1, b1, w2, b2, w3, b3 = prepared_params
    xp = jnp.pad(x, ((0, 0), (0, K_PAD - x.shape[1])))
    h = jnp.maximum(jnp.dot(xp.astype(jnp.bfloat16), w1,
                            preferred_element_type=jnp.float32) + b1, 0.0)
    h = jnp.maximum(jnp.dot(h.astype(jnp.bfloat16), w2,
                            preferred_element_type=jnp.float32) + b2, 0.0)
    h = jnp.maximum(jnp.dot(h.astype(jnp.bfloat16), w3,
                            preferred_element_type=jnp.float32) + b3, 0.0)
    return h


if __name__ == "__main__":
    key = jax.random.PRNGKey(0)
    kx, kp = jax.random.split(key)

    B = 8
    x = jax.random.normal(kx, (B, INPUT_SIZE), jnp.float32)
    params = prepare_params(init_params(kp))

    out = simplefc_forward(x, params)
    out = jax.block_until_ready(out)

    ref = reference_forward(x, params)
    assert out.shape == (B, H3), out.shape
    # bf16 weights/activations at the MXU boundary -> looser tolerance than pure f32.
    assert jnp.allclose(out, ref, atol=2e-2, rtol=2e-2), "mismatch vs JAX reference"

    print("KERNEL_OK")
</pallas_src>

<mosaic_0001>
module attributes {stable_mosaic.version = 11 : i64} {
  func.func @simplefc_kernel(%arg0: i32, %arg1: memref<8x896xf32, #tpu.memory_space<vmem>>, %arg2: memref<896x512xbf16, #tpu.memory_space<vmem>>, %arg3: memref<1x512xf32, #tpu.memory_space<vmem>>, %arg4: memref<512x256xbf16, #tpu.memory_space<vmem>>, %arg5: memref<1x256xf32, #tpu.memory_space<vmem>>, %arg6: memref<256x128xbf16, #tpu.memory_space<vmem>>, %arg7: memref<1x128xf32, #tpu.memory_space<vmem>>, %arg8: memref<8x128xf32, #tpu.memory_space<vmem>>) attributes {dimension_semantics = [#tpu.dimension_semantics<parallel>], iteration_bounds = array<i64: 1>, scalar_prefetch = 0 : i64, scratch_operands = 0 : i64, tpu.core_type = #tpu.core_type<tc>, window_params = [{transform_indices = @transform_0, window_bounds = array<i64: 8, 896>}, {pipeline_mode = #tpu.pipeline_mode<synchronous>, transform_indices = @transform_1, window_bounds = array<i64: 896, 512>}, {pipeline_mode = #tpu.pipeline_mode<synchronous>, transform_indices = @transform_2, window_bounds = array<i64: 1, 512>}, {pipeline_mode = #tpu.pipeline_mode<synchronous>, transform_indices = @transform_3, window_bounds = array<i64: 512, 256>}, {pipeline_mode = #tpu.pipeline_mode<synchronous>, transform_indices = @transform_4, window_bounds = array<i64: 1, 256>}, {pipeline_mode = #tpu.pipeline_mode<synchronous>, transform_indices = @transform_5, window_bounds = array<i64: 256, 128>}, {pipeline_mode = #tpu.pipeline_mode<synchronous>, transform_indices = @transform_6, window_bounds = array<i64: 1, 128>}, {transform_indices = @transform_7, window_bounds = array<i64: 8, 128>}]} {
    %c0 = arith.constant 0 : index
    %c0_0 = arith.constant 0 : index
    %0 = vector.load %arg1[%c0, %c0_0] : memref<8x896xf32, #tpu.memory_space<vmem>>, vector<8x896xf32>
    %1 = arith.truncf %0 : vector<8x896xf32> to vector<8x896xbf16>
    %c0_1 = arith.constant 0 : index
    %c0_2 = arith.constant 0 : index
    %2 = vector.load %arg2[%c0_1, %c0_2] : memref<896x512xbf16, #tpu.memory_space<vmem>>, vector<896x512xbf16>
    %cst = arith.constant dense<0.000000e+00> : vector<8x512xf32>
    %3 = tpu.matmul %1, %2, %cst {dimension_numbers = #tpu.dot_dimension_numbers<[1], [0], [0], [1], [0, 0, 1, 1], [], []>} : vector<8x896xbf16>, vector<896x512xbf16>, vector<8x512xf32> -> vector<8x512xf32>
    %c0_3 = arith.constant 0 : index
    %c0_4 = arith.constant 0 : index
    %4 = vector.load %arg3[%c0_3, %c0_4] : memref<1x512xf32, #tpu.memory_space<vmem>>, vector<1x512xf32>
    %5 = vector.broadcast %4 : vector<1x512xf32> to vector<8x512xf32>
    %6 = arith.addf %3, %5 : vector<8x512xf32>
    %cst_5 = arith.constant 0.000000e+00 : f32
    %7 = vector.broadcast %cst_5 : f32 to vector<8x512xf32>
    %8 = arith.maximumf %6, %7 : vector<8x512xf32>
    %9 = arith.truncf %8 : vector<8x512xf32> to vector<8x512xbf16>
    %c0_6 = arith.constant 0 : index
    %c0_7 = arith.constant 0 : index
    %10 = vector.load %arg4[%c0_6, %c0_7] : memref<512x256xbf16, #tpu.memory_space<vmem>>, vector<512x256xbf16>
    %cst_8 = arith.constant dense<0.000000e+00> : vector<8x256xf32>
    %11 = tpu.matmul %9, %10, %cst_8 {dimension_numbers = #tpu.dot_dimension_numbers<[1], [0], [0], [1], [0, 0, 1, 1], [], []>} : vector<8x512xbf16>, vector<512x256xbf16>, vector<8x256xf32> -> vector<8x256xf32>
    %c0_9 = arith.constant 0 : index
    %c0_10 = arith.constant 0 : index
    %12 = vector.load %arg5[%c0_9, %c0_10] : memref<1x256xf32, #tpu.memory_space<vmem>>, vector<1x256xf32>
    %13 = vector.broadcast %12 : vector<1x256xf32> to vector<8x256xf32>
    %14 = arith.addf %11, %13 : vector<8x256xf32>
    %cst_11 = arith.constant 0.000000e+00 : f32
    %15 = vector.broadcast %cst_11 : f32 to vector<8x256xf32>
    %16 = arith.maximumf %14, %15 : vector<8x256xf32>
    %17 = arith.truncf %16 : vector<8x256xf32> to vector<8x256xbf16>
    %c0_12 = arith.constant 0 : index
    %c0_13 = arith.constant 0 : index
    %18 = vector.load %arg6[%c0_12, %c0_13] : memref<256x128xbf16, #tpu.memory_space<vmem>>, vector<256x128xbf16>
    %cst_14 = arith.constant dense<0.000000e+00> : vector<8x128xf32>
    %19 = tpu.matmul %17, %18, %cst_14 {dimension_numbers = #tpu.dot_dimension_numbers<[1], [0], [0], [1], [0, 0, 1, 1], [], []>} : vector<8x256xbf16>, vector<256x128xbf16>, vector<8x128xf32> -> vector<8x128xf32>
    %c0_15 = arith.constant 0 : index
    %c0_16 = arith.constant 0 : index
    %20 = vector.load %arg7[%c0_15, %c0_16] : memref<1x128xf32, #tpu.memory_space<vmem>>, vector<1x128xf32>
    %21 = vector.broadcast %20 : vector<1x128xf32> to vector<8x128xf32>
    %22 = arith.addf %19, %21 : vector<8x128xf32>
    %cst_17 = arith.constant 0.000000e+00 : f32
    %23 = vector.broadcast %cst_17 : f32 to vector<8x128xf32>
    %24 = arith.maximumf %22, %23 : vector<8x128xf32>
    %c0_18 = arith.constant 0 : index
    %c0_19 = arith.constant 0 : index
    %25 = vector.load %arg8[%c0_18, %c0_19] : memref<8x128xf32, #tpu.memory_space<vmem>>, vector<8x128xf32>
    tpu.vector_store %arg8[%c0_18, %c0_19], %24 {strides = array<i32>} : memref<8x128xf32, #tpu.memory_space<vmem>>, vector<8x128xf32>,
    return
  }
  func.func @transform_0(%arg0: i32) -> (i32, i32) {
    %c0_i32 = arith.constant 0 : i32
    %c0_i32_0 = arith.constant 0 : i32
    return %arg0, %c0_i32 : i32, i32
  }
  func.func @transform_1(%arg0: i32) -> (i32, i32) {
    %c0_i32 = arith.constant 0 : i32
    %c0_i32_0 = arith.constant 0 : i32
    %c0_i32_1 = arith.constant 0 : i32
    return %c0_i32, %c0_i32_0 : i32, i32
  }
  func.func @transform_2(%arg0: i32) -> (i32, i32) {
    %c0_i32 = arith.constant 0 : i32
    %c0_i32_0 = arith.constant 0 : i32
    %c0_i32_1 = arith.constant 0 : i32
    return %c0_i32, %c0_i32_0 : i32, i32
  }
  func.func @transform_3(%arg0: i32) -> (i32, i32) {
    %c0_i32 = arith.constant 0 : i32
    %c0_i32_0 = arith.constant 0 : i32
    %c0_i32_1 = arith.constant 0 : i32
    return %c0_i32, %c0_i32_0 : i32, i32
  }
  func.func @transform_4(%arg0: i32) -> (i32, i32) {
    %c0_i32 = arith.constant 0 : i32
    %c0_i32_0 = arith.constant 0 : i32
    %c0_i32_1 = arith.constant 0 : i32
    return %c0_i32, %c0_i32_0 : i32, i32
  }
  func.func @transform_5(%arg0: i32) -> (i32, i32) {
    %c0_i32 = arith.constant 0 : i32
    %c0_i32_0 = arith.constant 0 : i32
    %c0_i32_1 = arith.constant 0 : i32
    return %c0_i32, %c0_i32_0 : i32, i32
  }
  func.func @transform_6(%arg0: i32) -> (i32, i32) {
    %c0_i32 = arith.constant 0 : i32
    %c0_i32_0 = arith.constant 0 : i32
    %c0_i32_1 = arith.constant 0 : i32
    return %c0_i32, %c0_i32_0 : i32, i32
  }
  func.func @transform_7(%arg0: i32) -> (i32, i32) {
    %c0_i32 = arith.constant 0 : i32
    %c0_i32_0 = arith.constant 0 : i32
    return %arg0, %c0_i32 : i32, i32
  }
}

</mosaic_0001>

<llo_original>
// kernel: simplefc_forward.1
$region0: #{simplefc_forward.1}
  #allocation0 [shape = 'u32[]', space=smem, size = 0x4, offset = 0x4, fixed_abs, tag = 'smem constant byte address 0x4 - core index']
  #allocation1 [shape = 'u32[72,128]{1,0:T(1,128)}', space=vmem, size = 0x9000, scoped, tag = 'internal scratch']
  %s0 = inlined_call_operand.vmem [shape: f32[8,896], index: 0, kind: input, shape index: {}]
  %s1 = inlined_call_operand.hbm [shape: bf16[896,512], index: 1, kind: input, shape index: {}]
  %s2 = inlined_call_operand.vmem [shape: f32[1,512], index: 2, kind: input, shape index: {}]
  %s3 = inlined_call_operand.hbm [shape: bf16[512,256], index: 3, kind: input, shape index: {}]
  %s4 = inlined_call_operand.vmem [shape: f32[1,256], index: 4, kind: input, shape index: {}]
  %s5 = inlined_call_operand.hbm [shape: bf16[256,128], index: 5, kind: input, shape index: {}]
  %s6 = inlined_call_operand.vmem [shape: f32[1,128], index: 6, kind: input, shape index: {}]
  %s7 = inlined_call_operand.hbm [shape: f32[8,128], index: 7, kind: output, shape index: {}]
  %s8 = sld [smem:[#allocation0]]
  $region50: #{simplefc_forward.1} parent=0
    _
  %s10 = ssub.s32 1, %s8
  %s11 = scalar_select 0, %s10, %s8
  $region1: #{simplefc_forward.1} parent=0
    #allocation2 [shape = 'u8[917504]{0}', space=vmem, size = 0xe0000, scoped, tag = 'input window, operand 1, single buffered']
    #allocation3 [shape = 's32[1]{0}', space=sflag, size = 0x4, scoped, tag = 'scoped memory for simplefc_forward.1']
    #allocation4 [shape = 's32[1]{0}', space=sflag, size = 0x4, scoped, tag = 'scoped memory for simplefc_forward.1']
    #allocation5 [shape = 'u8[262144]{0}', space=vmem, size = 0x40000, scoped, tag = 'input window, operand 3, single buffered']
    #allocation6 [shape = 's32[1]{0}', space=sflag, size = 0x4, scoped, tag = 'scoped memory for simplefc_forward.1']
    #allocation7 [shape = 'u8[65536]{0}', space=vmem, size = 0x10000, scoped, tag = 'input window, operand 5, single buffered']
    #allocation8 [shape = 'u8[4096]{0}', space=vmem, size = 0x1000, scoped, tag = 'output window, operand 0, single buffered']
    %12 = vsyncpa [#allocation3], 0
    %13 = vsyncpa [#allocation6], 0
    %14 = vsyncpa [#allocation4], 0
    // Predicated region
    $region2: #{simplefc_forward.1} parent=1 // pred_check
      _
    $region3: #{simplefc_forward.1} parent=1 // pred_check_branch
      %16 = sbr.rel (0) target = $region5
    $region4: #{simplefc_forward.1} parent=1 // pred_region
      _
    $region5: #{simplefc_forward.1} parent=1 // pred_fallthru
      _
    // Predicated region
    $region6: #{simplefc_forward.1} parent=1 // pred_check
      _
    $region7: #{simplefc_forward.1} parent=1 // pred_check_branch
      %18 = sbr.rel (0) target = $region9
    $region8: #{simplefc_forward.1} parent=1 // pred_region
      %20 = vsyncadd [#allocation3], 0
      %s21 = sshll.u32 %s1, 4
      %s22 = int_to_ptr.hbm [resolvable:$true] %s21
      %s23 = sshll.u32 [#allocation2], 4
      %s24 = int_to_ptr.vmem [resolvable:$true] %s23
      %29 = dma.hbm_to_vmem [thread:$0]  %s22, 28672, %s24, [#allocation3], 256, 256, 16
    $region9: #{simplefc_forward.1} parent=1 // pred_fallthru
      _
    // Predicated region
    $region10: #{simplefc_forward.1} parent=1 // pred_check
      _
    $region11: #{simplefc_forward.1} parent=1 // pred_check_branch
      %31 = sbr.rel (0) target = $region13
    $region12: #{simplefc_forward.1} parent=1 // pred_region
      _
    $region13: #{simplefc_forward.1} parent=1 // pred_fallthru
      _
    // Predicated region
    $region14: #{simplefc_forward.1} parent=1 // pred_check
      _
    $region15: #{simplefc_forward.1} parent=1 // pred_check_branch
      %33 = sbr.rel (0) target = $region17
    $region16: #{simplefc_forward.1} parent=1 // pred_region
      %35 = vsyncadd [#allocation6], 0
      %s36 = sshll.u32 %s3, 4
      %s37 = int_to_ptr.hbm [resolvable:$true] %s36
      %s38 = sshll.u32 [#allocation5], 4
      %s39 = int_to_ptr.vmem [resolvable:$true] %s38
      %44 = dma.hbm_to_vmem [thread:$0]  %s37, 8192, %s39, [#allocation6], 128, 128, 8
    $region17: #{simplefc_forward.1} parent=1 // pred_fallthru
      _
    // Predicated region
    $region18: #{simplefc_forward.1} parent=1 // pred_check
      _
    $region19: #{simplefc_forward.1} parent=1 // pred_check_branch
      %46 = sbr.rel (0) target = $region21
    $region20: #{simplefc_forward.1} parent=1 // pred_region
      _
    $region21: #{simplefc_forward.1} parent=1 // pred_fallthru
      _
    // Predicated region
    $region22: #{simplefc_forward.1} parent=1 // pred_check
      _
    $region23: #{simplefc_forward.1} parent=1 // pred_check_branch
      %48 = sbr.rel (0) target = $region25
    $region24: #{simplefc_forward.1} parent=1 // pred_region
      %50 = vsyncadd [#allocation6], 0
      %s51 = sshll.u32 %s5, 4
      %s52 = int_to_ptr.hbm [resolvable:$true] %s51
      %s53 = sshll.u32 [#allocation7], 4
      %s54 = int_to_ptr.vmem [resolvable:$true] %s53
      %59 = dma.hbm_to_vmem [thread:$0]  %s52, 2048, %s54, [#allocation6], 64, 64, 4
    $region25: #{simplefc_forward.1} parent=1 // pred_fallthru
      _
    // Predicated region
    $region26: #{simplefc_forward.1} parent=1 // pred_check
      _
    $region27: #{simplefc_forward.1} parent=1 // pred_check_branch
      %61 = sbr.rel (0) target = $region29
    $region28: #{simplefc_forward.1} parent=1 // pred_region
      _
    $region29: #{simplefc_forward.1} parent=1 // pred_fallthru
      _
    // Predicated region
    $region30: #{simplefc_forward.1} parent=1 // pred_check
      _
    $region31: #{simplefc_forward.1} parent=1 // pred_check_branch
      %63 = sbr.rel (0) target = $region33
    $region32: #{simplefc_forward.1} parent=1 // pred_region
      %65 = dma.done [#allocation3], 28672
    $region33: #{simplefc_forward.1} parent=1 // pred_fallthru
      _
    // Predicated region
    $region34: #{simplefc_forward.1} parent=1 // pred_check
      _
    $region35: #{simplefc_forward.1} parent=1 // pred_check_branch
      %67 = sbr.rel (0) target = $region37
    $region36: #{simplefc_forward.1} parent=1 // pred_region
      %69 = dma.done [#allocation6], 8192
    $region37: #{simplefc_forward.1} parent=1 // pred_fallthru
      _
    // Predicated region
    $region38: #{simplefc_forward.1} parent=1 // pred_check
      _
    $region39: #{simplefc_forward.1} parent=1 // pred_check_branch
      %71 = sbr.rel (0) target = $region41
    $region40: #{simplefc_forward.1} parent=1 // pred_region
      %73 = dma.done [#allocation6], 2048
    $region41: #{simplefc_forward.1} parent=1 // pred_fallthru
      _
    %v74 = vld [vmem:[%s0] sm:$0xff]
    %v75 = vld [vmem:[%s0 + $0x8] sm:$0xff]
    %v76 = vld [vmem:[%s0 + $0x10] sm:$0xff]
    %v77 = vld [vmem:[%s0 + $0x18] sm:$0xff]
    %v78 = vld [vmem:[%s0 + $0x20] sm:$0xff]
    %v79 = vld [vmem:[%s0 + $0x28] sm:$0xff]
    %v80 = vld [vmem:[%s0 + $0x30] sm:$0xff]
    %v81 = vpack.c.bf16 %v74, %v74
    %v82 = vpack.c.bf16 %v75, %v75
    %v83 = vpack.c.bf16 %v76, %v76
    %v84 = vpack.c.bf16 %v77, %v77
    %v85 = vpack.c.bf16 %v78, %v78
    %v86 = vpack.c.bf16 %v79, %v79
    %v87 = vpack.c.bf16 %v80, %v80
    %v88 = vld [vmem:[#allocation2] sm:$0xff]
    %v89 = vld [vmem:[#allocation2 + $0x8] sm:$0xff]
    %v90 = vld [vmem:[#allocation2 + $0x10] sm:$0xff]
    %v91 = vld [vmem:[#allocation2 + $0x18] sm:$0xff]
    %v92 = vld [vmem:[#allocation2 + $0x20] sm:$0xff]
    %v93 = vld [vmem:[#allocation2 + $0x28] sm:$0xff]
    %v94 = vld [vmem:[#allocation2 + $0x30] sm:$0xff]
    %v95 = vld [vmem:[#allocation2 + $0x38] sm:$0xff]
    %v96 = vld [vmem:[#allocation2 + $0x40] sm:$0xff]
    %v97 = vld [vmem:[#allocation2 + $0x48] sm:$0xff]
    %v98 = vld [vmem:[#allocation2 + $0x50] sm:$0xff]
    %v99 = vld [vmem:[#allocation2 + $0x58] sm:$0xff]
    %v100 = vld [vmem:[#allocation2 + $0x60] sm:$0xff]
    %v101 = vld [vmem:[#allocation2 + $0x68] sm:$0xff]
    %v102 = vld [vmem:[#allocation2 + $0x70] sm:$0xff]
    %v103 = vld [vmem:[#allocation2 + $0x78] sm:$0xff]
    %v104 = vld [vmem:[#allocation2 + $0x80] sm:$0xff]
    %v105 = vld [vmem:[#allocation2 + $0x88] sm:$0xff]
    %v106 = vld [vmem:[#allocation2 + $0x90] sm:$0xff]
    %v107 = vld [vmem:[#allocation2 + $0x98] sm:$0xff]
    %v108 = vld [vmem:[#allocation2 + $0xa0] sm:$0xff]
    %v109 = vld [vmem:[#allocation2 + $0xa8] sm:$0xff]
    %v110 = vld [vmem:[#allocation2 + $0xb0] sm:$0xff]
    %v111 = vld [vmem:[#allocation2 + $0xb8] sm:$0xff]
    %v112 = vld [vmem:[#allocation2 + $0xc0] sm:$0xff]
    %v113 = vld [vmem:[#allocation2 + $0xc8] sm:$0xff]
    %v114 = vld [vmem:[#allocation2 + $0xd0] sm:$0xff]
    %v115 = vld [vmem:[#allocation2 + $0xd8] sm:$0xff]
    %v116 = vld [vmem:[#allocation2 + $0xe0] sm:$0xff]
    %v117 = vld [vmem:[#allocation2 + $0xe8] sm:$0xff]
    %v118 = vld [vmem:[#allocation2 + $0xf0] sm:$0xff]
    %v119 = vld [vmem:[#allocation2 + $0xf8] sm:$0xff]
    %v120 = vld [vmem:[#allocation2 + $0x100] sm:$0xff]
    %v121 = vld [vmem:[#allocation2 + $0x108] sm:$0xff]
    %v122 = vld [vmem:[#allocation2 + $0x110] sm:$0xff]
    %v123 = vld [vmem:[#allocation2 + $0x118] sm:$0xff]
    %v124 = vld [vmem:[#allocation2 + $0x120] sm:$0xff]
    %v125 = vld [vmem:[#allocation2 + $0x128] sm:$0xff]
    %v126 = vld [vmem:[#allocation2 + $0x130] sm:$0xff]
    %v127 = vld [vmem:[#allocation2 + $0x138] sm:$0xff]
    %v128 = vld [vmem:[#allocation2 + $0x140] sm:$0xff]
    %v129 = vld [vmem:[#allocation2 + $0x148] sm:$0xff]
    %v130 = vld [vmem:[#allocation2 + $0x150] sm:$0xff]
    %v131 = vld [vmem:[#allocation2 + $0x158] sm:$0xff]
    %v132 = vld [vmem:[#allocation2 + $0x160] sm:$0xff]
    %v133 = vld [vmem:[#allocation2 + $0x168] sm:$0xff]
    %v134 = vld [vmem:[#allocation2 + $0x170] sm:$0xff]
    %v135 = vld [vmem:[#allocation2 + $0x178] sm:$0xff]
    %v136 = vld [vmem:[#allocation2 + $0x180] sm:$0xff]
    %v137 = vld [vmem:[#allocation2 + $0x188] sm:$0xff]
    %v138 = vld [vmem:[#allocation2 + $0x190] sm:$0xff]
    %v139 = vld [vmem:[#allocation2 + $0x198] sm:$0xff]
    %v140 = vld [vmem:[#allocation2 + $0x1a0] sm:$0xff]
    %v141 = vld [vmem:[#allocation2 + $0x1a8] sm:$0xff]
    %v142 = vld [vmem:[#allocation2 + $0x1b0] sm:$0xff]
    %v143 = vld [vmem:[#allocation2 + $0x1b8] sm:$0xff]
    %v144 = vld [vmem:[#allocation2 + $0x1c0] sm:$0xff]
    %v145 = vld [vmem:[#allocation2 + $0x1c8] sm:$0xff]
    %v146 = vld [vmem:[#allocation2 + $0x1d0] sm:$0xff]
    %v147 = vld [vmem:[#allocation2 + $0x1d8] sm:$0xff]
    %v148 = vld [vmem:[#allocation2 + $0x1e0] sm:$0xff]
    %v149 = vld [vmem:[#allocation2 + $0x1e8] sm:$0xff]
    %v150 = vld [vmem:[#allocation2 + $0x1f0] sm:$0xff]
    %v151 = vld [vmem:[#allocation2 + $0x1f8] sm:$0xff]
    %v152 = vld [vmem:[#allocation2 + $0x200] sm:$0xff]
    %v153 = vld [vmem:[#allocation2 + $0x208] sm:$0xff]
    %v154 = vld [vmem:[#allocation2 + $0x210] sm:$0xff]
    %v155 = vld [vmem:[#allocation2 + $0x218] sm:$0xff]
    %v156 = vld [vmem:[#allocation2 + $0x220] sm:$0xff]
    %v157 = vld [vmem:[#allocation2 + $0x228] sm:$0xff]
    %v158 = vld [vmem:[#allocation2 + $0x230] sm:$0xff]
    %v159 = vld [vmem:[#allocation2 + $0x238] sm:$0xff]
    %v160 = vld [vmem:[#allocation2 + $0x240] sm:$0xff]
    %v161 = vld [vmem:[#allocation2 + $0x248] sm:$0xff]
    %v162 = vld [vmem:[#allocation2 + $0x250] sm:$0xff]
    %v163 = vld [vmem:[#allocation2 + $0x258] sm:$0xff]
    %v164 = vld [vmem:[#allocation2 + $0x260] sm:$0xff]
    %v165 = vld [vmem:[#allocation2 + $0x268] sm:$0xff]
    %v166 = vld [vmem:[#allocation2 + $0x270] sm:$0xff]
    %v167 = vld [vmem:[#allocation2 + $0x278] sm:$0xff]
    %v168 = vld [vmem:[#allocation2 + $0x280] sm:$0xff]
    %v169 = vld [vmem:[#allocation2 + $0x288] sm:$0xff]
    %v170 = vld [vmem:[#allocation2 + $0x290] sm:$0xff]
    %v171 = vld [vmem:[#allocation2 + $0x298] sm:$0xff]
    %v172 = vld [vmem:[#allocation2 + $0x2a0] sm:$0xff]
    %v173 = vld [vmem:[#allocation2 + $0x2a8] sm:$0xff]
    %v174 = vld [vmem:[#allocation2 + $0x2b0] sm:$0xff]
    %v175 = vld [vmem:[#allocation2 + $0x2b8] sm:$0xff]
    %v176 = vld [vmem:[#allocation2 + $0x2c0] sm:$0xff]
    %v177 = vld [vmem:[#allocation2 + $0x2c8] sm:$0xff]
    %v178 = vld [vmem:[#allocation2 + $0x2d0] sm:$0xff]
    %v179 = vld [vmem:[#allocation2 + $0x2d8] sm:$0xff]
    %v180 = vld [vmem:[#allocation2 + $0x2e0] sm:$0xff]
    %v181 = vld [vmem:[#allocation2 + $0x2e8] sm:$0xff]
    %v182 = vld [vmem:[#allocation2 + $0x2f0] sm:$0xff]
    %v183 = vld [vmem:[#allocation2 + $0x2f8] sm:$0xff]
    %v184 = vld [vmem:[#allocation2 + $0x300] sm:$0xff]
    %v185 = vld [vmem:[#allocation2 + $0x308] sm:$0xff]
    %v186 = vld [vmem:[#allocation2 + $0x310] sm:$0xff]
    %v187 = vld [vmem:[#allocation2 + $0x318] sm:$0xff]
    %v188 = vld [vmem:[#allocation2 + $0x320] sm:$0xff]
    %v189 = vld [vmem:[#allocation2 + $0x328] sm:$0xff]
    %v190 = vld [vmem:[#allocation2 + $0x330] sm:$0xff]
    %v191 = vld [vmem:[#allocation2 + $0x338] sm:$0xff]
    %v192 = vld [vmem:[#allocation2 + $0x340] sm:$0xff]
    %v193 = vld [vmem:[#allocation2 + $0x348] sm:$0xff]
    %v194 = vld [vmem:[#allocation2 + $0x350] sm:$0xff]
    %v195 = vld [vmem:[#allocation2 + $0x358] sm:$0xff]
    %v196 = vld [vmem:[#allocation2 + $0x360] sm:$0xff]
    %v197 = vld [vmem:[#allocation2 + $0x368] sm:$0xff]
    %v198 = vld [vmem:[#allocation2 + $0x370] sm:$0xff]
    %v199 = vld [vmem:[#allocation2 + $0x378] sm:$0xff]
    %v200 = vld [vmem:[#allocation2 + $0x380] sm:$0xff]
    %v201 = vld [vmem:[#allocation2 + $0x388] sm:$0xff]
    %v202 = vld [vmem:[#allocation2 + $0x390] sm:$0xff]
    %v203 = vld [vmem:[#allocation2 + $0x398] sm:$0xff]
    %v204 = vld [vmem:[#allocation2 + $0x3a0] sm:$0xff]
    %v205 = vld [vmem:[#allocation2 + $0x3a8] sm:$0xff]
    %v206 = vld [vmem:[#allocation2 + $0x3b0] sm:$0xff]
    %v207 = vld [vmem:[#allocation2 + $0x3b8] sm:$0xff]
    %v208 = vld [vmem:[#allocation2 + $0x3c0] sm:$0xff]
    %v209 = vld [vmem:[#allocation2 + $0x3c8] sm:$0xff]
    %v210 = vld [vmem:[#allocation2 + $0x3d0] sm:$0xff]
    %v211 = vld [vmem:[#allocation2 + $0x3d8] sm:$0xff]
    %v212 = vld [vmem:[#allocation2 + $0x3e0] sm:$0xff]
    %v213 = vld [vmem:[#allocation2 + $0x3e8] sm:$0xff]
    %v214 = vld [vmem:[#allocation2 + $0x3f0] sm:$0xff]
    %v215 = vld [vmem:[#allocation2 + $0x3f8] sm:$0xff]
    %v216 = vld [vmem:[#allocation2 + $0x400] sm:$0xff]
    %v217 = vld [vmem:[#allocation2 + $0x408] sm:$0xff]
    %v218 = vld [vmem:[#allocation2 + $0x410] sm:$0xff]
    %v219 = vld [vmem:[#allocation2 + $0x418] sm:$0xff]
    %v220 = vld [vmem:[#allocation2 + $0x420] sm:$0xff]
    %v221 = vld [vmem:[#allocation2 + $0x428] sm:$0xff]
    %v222 = vld [vmem:[#allocation2 + $0x430] sm:$0xff]
    %v223 = vld [vmem:[#allocation2 + $0x438] sm:$0xff]
    %v224 = vld [vmem:[#allocation2 + $0x440] sm:$0xff]
    %v225 = vld [vmem:[#allocation2 + $0x448] sm:$0xff]
    %v226 = vld [vmem:[#allocation2 + $0x450] sm:$0xff]
    %v227 = vld [vmem:[#allocation2 + $0x458] sm:$0xff]
    %v228 = vld [vmem:[#allocation2 + $0x460] sm:$0xff]
    %v229 = vld [vmem:[#allocation2 + $0x468] sm:$0xff]
    %v230 = vld [vmem:[#allocation2 + $0x470] sm:$0xff]
    %v231 = vld [vmem:[#allocation2 + $0x478] sm:$0xff]
    %v232 = vld [vmem:[#allocation2 + $0x480] sm:$0xff]
    %v233 = vld [vmem:[#allocation2 + $0x488] sm:$0xff]
    %v234 = vld [vmem:[#allocation2 + $0x490] sm:$0xff]
    %v235 = vld [vmem:[#allocation2 + $0x498] sm:$0xff]
    %v236 = vld [vmem:[#allocation2 + $0x4a0] sm:$0xff]
    %v237 = vld [vmem:[#allocation2 + $0x4a8] sm:$0xff]
    %v238 = vld [vmem:[#allocation2 + $0x4b0] sm:$0xff]
    %v239 = vld [vmem:[#allocation2 + $0x4b8] sm:$0xff]
    %v240 = vld [vmem:[#allocation2 + $0x4c0] sm:$0xff]
    %v241 = vld [vmem:[#allocation2 + $0x4c8] sm:$0xff]
    %v242 = vld [vmem:[#allocation2 + $0x4d0] sm:$0xff]
    %v243 = vld [vmem:[#allocation2 + $0x4d8] sm:$0xff]
    %v244 = vld [vmem:[#allocation2 + $0x4e0] sm:$0xff]
    %v245 = vld [vmem:[#allocation2 + $0x4e8] sm:$0xff]
    %v246 = vld [vmem:[#allocation2 + $0x4f0] sm:$0xff]
    %v247 = vld [vmem:[#allocation2 + $0x4f8] sm:$0xff]
    %v248 = vld [vmem:[#allocation2 + $0x500] sm:$0xff]
    %v249 = vld [vmem:[#allocation2 + $0x508] sm:$0xff]
    %v250 = vld [vmem:[#allocation2 + $0x510] sm:$0xff]
    %v251 = vld [vmem:[#allocation2 + $0x518] sm:$0xff]
    %v252 = vld [vmem:[#allocation2 + $0x520] sm:$0xff]
    %v253 = vld [vmem:[#allocation2 + $0x528] sm:$0xff]
    %v254 = vld [vmem:[#allocation2 + $0x530] sm:$0xff]
    %v255 = vld [vmem:[#allocation2 + $0x538] sm:$0xff]
    %v256 = vld [vmem:[#allocation2 + $0x540] sm:$0xff]
    %v257 = vld [vmem:[#allocation2 + $0x548] sm:$0xff]
    %v258 = vld [vmem:[#allocation2 + $0x550] sm:$0xff]
    %v259 = vld [vmem:[#allocation2 + $0x558] sm:$0xff]
    %v260 = vld [vmem:[#allocation2 + $0x560] sm:$0xff]
    %v261 = vld [vmem:[#allocation2 + $0x568] sm:$0xff]
    %v262 = vld [vmem:[#allocation2 + $0x570] sm:$0xff]
    %v263 = vld [vmem:[#allocation2 + $0x578] sm:$0xff]
    %v264 = vld [vmem:[#allocation2 + $0x580] sm:$0xff]
    %v265 = vld [vmem:[#allocation2 + $0x588] sm:$0xff]
    %v266 = vld [vmem:[#allocation2 + $0x590] sm:$0xff]
    %v267 = vld [vmem:[#allocation2 + $0x598] sm:$0xff]
    %v268 = vld [vmem:[#allocation2 + $0x5a0] sm:$0xff]
    %v269 = vld [vmem:[#allocation2 + $0x5a8] sm:$0xff]
    %v270 = vld [vmem:[#allocation2 + $0x5b0] sm:$0xff]
    %v271 = vld [vmem:[#allocation2 + $0x5b8] sm:$0xff]
    %v272 = vld [vmem:[#allocation2 + $0x5c0] sm:$0xff]
    %v273 = vld [vmem:[#allocation2 + $0x5c8] sm:$0xff]
    %v274 = vld [vmem:[#allocation2 + $0x5d0] sm:$0xff]
    %v275 = vld [vmem:[#allocation2 + $0x5d8] sm:$0xff]
    %v276 = vld [vmem:[#allocation2 + $0x5e0] sm:$0xff]
    %v277 = vld [vmem:[#allocation2 + $0x5e8] sm:$0xff]
    %v278 = vld [vmem:[#allocation2 + $0x5f0] sm:$0xff]
    %v279 = vld [vmem:[#allocation2 + $0x5f8] sm:$0xff]
    %v280 = vld [vmem:[#allocation2 + $0x600] sm:$0xff]
    %v281 = vld [vmem:[#allocation2 + $0x608] sm:$0xff]
    %v282 = vld [vmem:[#allocation2 + $0x610] sm:$0xff]
    %v283 = vld [vmem:[#allocation2 + $0x618] sm:$0xff]
    %v284 = vld [vmem:[#allocation2 + $0x620] sm:$0xff]
    %v285 = vld [vmem:[#allocation2 + $0x628] sm:$0xff]
    %v286 = vld [vmem:[#allocation2 + $0x630] sm:$0xff]
    %v287 = vld [vmem:[#allocation2 + $0x638] sm:$0xff]
    %v288 = vld [vmem:[#allocation2 + $0x640] sm:$0xff]
    %v289 = vld [vmem:[#allocation2 + $0x648] sm:$0xff]
    %v290 = vld [vmem:[#allocation2 + $0x650] sm:$0xff]
    %v291 = vld [vmem:[#allocation2 + $0x658] sm:$0xff]
    %v292 = vld [vmem:[#allocation2 + $0x660] sm:$0xff]
    %v293 = vld [vmem:[#allocation2 + $0x668] sm:$0xff]
    %v294 = vld [vmem:[#allocation2 + $0x670] sm:$0xff]
    %v295 = vld [vmem:[#allocation2 + $0x678] sm:$0xff]
    %v296 = vld [vmem:[#allocation2 + $0x680] sm:$0xff]
    %v297 = vld [vmem:[#allocation2 + $0x688] sm:$0xff]
    %v298 = vld [vmem:[#allocation2 + $0x690] sm:$0xff]
    %v299 = vld [vmem:[#allocation2 + $0x698] sm:$0xff]
    %v300 = vld [vmem:[#allocation2 + $0x6a0] sm:$0xff]
    %v301 = vld [vmem:[#allocation2 + $0x6a8] sm:$0xff]
    %v302 = vld [vmem:[#allocation2 + $0x6b0] sm:$0xff]
    %v303 = vld [vmem:[#allocation2 + $0x6b8] sm:$0xff]
    %v304 = vld [vmem:[#allocation2 + $0x6c0] sm:$0xff]
    %v305 = vld [vmem:[#allocation2 + $0x6c8] sm:$0xff]
    %v306 = vld [vmem:[#allocation2 + $0x6d0] sm:$0xff]
    %v307 = vld [vmem:[#allocation2 + $0x6d8] sm:$0xff]
    %v308 = vld [vmem:[#allocation2 + $0x6e0] sm:$0xff]
    %v309 = vld [vmem:[#allocation2 + $0x6e8] sm:$0xff]
    %v310 = vld [vmem:[#allocation2 + $0x6f0] sm:$0xff]
    %v311 = vld [vmem:[#allocation2 + $0x6f8] sm:$0xff]
    %v312 = vld [vmem:[%s2] sm:$0xf]
    %v314 = vperm.slane %v312, 0
    %v315 = vperm.slane %v312, 1
    %v316 = vperm.slane %v312, 2
    %v317 = vperm.slane %v312, 3
    %v546 = vunpack.c.l.b16 %v88
    %v547 = vunpack.c.h.b16 %v88
    %v548 = vunpack.c.l.b16 %v89
    %v549 = vunpack.c.h.b16 %v89
    %v550 = vunpack.c.l.b16 %v90
    %v551 = vunpack.c.h.b16 %v90
    %v552 = vunpack.c.l.b16 %v91
    %v553 = vunpack.c.h.b16 %v91
    %v554 = vunpack.c.l.b16 %v92
    %v555 = vunpack.c.h.b16 %v92
    %v556 = vunpack.c.l.b16 %v93
    %v557 = vunpack.c.h.b16 %v93
    %v558 = vunpack.c.l.b16 %v94
    %v559 = vunpack.c.h.b16 %v94
    %v560 = vunpack.c.l.b16 %v95
    %v561 = vunpack.c.h.b16 %v95
    %v562 = vunpack.c.l.b16 %v96
    %v563 = vunpack.c.h.b16 %v96
    %v564 = vunpack.c.l.b16 %v97
    %v565 = vunpack.c.h.b16 %v97
    %v566 = vunpack.c.l.b16 %v98
    %v567 = vunpack.c.h.b16 %v98
    %v568 = vunpack.c.l.b16 %v99
    %v569 = vunpack.c.h.b16 %v99
    %v570 = vunpack.c.l.b16 %v100
    %v571 = vunpack.c.h.b16 %v100
    %v572 = vunpack.c.l.b16 %v101
    %v573 = vunpack.c.h.b16 %v101
    %v574 = vunpack.c.l.b16 %v102
    %v575 = vunpack.c.h.b16 %v102
    %v576 = vunpack.c.l.b16 %v103
    %v577 = vunpack.c.h.b16 %v103
    %v578 = vunpack.c.l.b16 %v104
    %v579 = vunpack.c.h.b16 %v104
    %v580 = vunpack.c.l.b16 %v105
    %v581 = vunpack.c.h.b16 %v105
    %v582 = vunpack.c.l.b16 %v106
    %v583 = vunpack.c.h.b16 %v106
    %v584 = vunpack.c.l.b16 %v107
    %v585 = vunpack.c.h.b16 %v107
    %v586 = vunpack.c.l.b16 %v108
    %v587 = vunpack.c.h.b16 %v108
    %v588 = vunpack.c.l.b16 %v109
    %v589 = vunpack.c.h.b16 %v109
    %v590 = vunpack.c.l.b16 %v110
    %v591 = vunpack.c.h.b16 %v110
    %v592 = vunpack.c.l.b16 %v111
    %v593 = vunpack.c.h.b16 %v111
    %v594 = vunpack.c.l.b16 %v112
    %v595 = vunpack.c.h.b16 %v112
    %v596 = vunpack.c.l.b16 %v113
    %v597 = vunpack.c.h.b16 %v113
    %v598 = vunpack.c.l.b16 %v114
    %v599 = vunpack.c.h.b16 %v114
    %v600 = vunpack.c.l.b16 %v115
    %v601 = vunpack.c.h.b16 %v115
    %v602 = vunpack.c.l.b16 %v116
    %v603 = vunpack.c.h.b16 %v116
    %v604 = vunpack.c.l.b16 %v117
    %v605 = vunpack.c.h.b16 %v117
    %v606 = vunpack.c.l.b16 %v118
    %v607 = vunpack.c.h.b16 %v118
    %v608 = vunpack.c.l.b16 %v119
    %v609 = vunpack.c.h.b16 %v119
    %v610 = vunpack.c.l.b16 %v120
    %v611 = vunpack.c.h.b16 %v120
    %v612 = vunpack.c.l.b16 %v121
    %v613 = vunpack.c.h.b16 %v121
    %v614 = vunpack.c.l.b16 %v122
    %v615 = vunpack.c.h.b16 %v122
    %v616 = vunpack.c.l.b16 %v123
    %v617 = vunpack.c.h.b16 %v123
    %v618 = vunpack.c.l.b16 %v124
    %v619 = vunpack.c.h.b16 %v124
    %v620 = vunpack.c.l.b16 %v125
    %v621 = vunpack.c.h.b16 %v125
    %v622 = vunpack.c.l.b16 %v126
    %v623 = vunpack.c.h.b16 %v126
    %v624 = vunpack.c.l.b16 %v127
    %v625 = vunpack.c.h.b16 %v127
    %v626 = vunpack.c.l.b16 %v128
    %v627 = vunpack.c.h.b16 %v128
    %v628 = vunpack.c.l.b16 %v129
    %v629 = vunpack.c.h.b16 %v129
    %v630 = vunpack.c.l.b16 %v130
    %v631 = vunpack.c.h.b16 %v130
    %v632 = vunpack.c.l.b16 %v131
    %v633 = vunpack.c.h.b16 %v131
    %v634 = vunpack.c.l.b16 %v132
    %v635 = vunpack.c.h.b16 %v132
    %v636 = vunpack.c.l.b16 %v133
    %v637 = vunpack.c.h.b16 %v133
    %v638 = vunpack.c.l.b16 %v134
    %v639 = vunpack.c.h.b16 %v134
    %v640 = vunpack.c.l.b16 %v135
    %v641 = vunpack.c.h.b16 %v135
    %v642 = vunpack.c.l.b16 %v136
    %v643 = vunpack.c.h.b16 %v136
    %v644 = vunpack.c.l.b16 %v137
    %v645 = vunpack.c.h.b16 %v137
    %v646 = vunpack.c.l.b16 %v138
    %v647 = vunpack.c.h.b16 %v138
    %v648 = vunpack.c.l.b16 %v139
    %v649 = vunpack.c.h.b16 %v139
    %v650 = vunpack.c.l.b16 %v140
    %v651 = vunpack.c.h.b16 %v140
    %v652 = vunpack.c.l.b16 %v141
    %v653 = vunpack.c.h.b16 %v141
    %v654 = vunpack.c.l.b16 %v142
    %v655 = vunpack.c.h.b16 %v142
    %v656 = vunpack.c.l.b16 %v143
    %v657 = vunpack.c.h.b16 %v143
    %v658 = vunpack.c.l.b16 %v144
    %v659 = vunpack.c.h.b16 %v144
    %v660 = vunpack.c.l.b16 %v145
    %v661 = vunpack.c.h.b16 %v145
    %v662 = vunpack.c.l.b16 %v146
    %v663 = vunpack.c.h.b16 %v146
    %v664 = vunpack.c.l.b16 %v147
    %v665 = vunpack.c.h.b16 %v147
    %v666 = vunpack.c.l.b16 %v148
    %v667 = vunpack.c.h.b16 %v148
    %v668 = vunpack.c.l.b16 %v149
    %v669 = vunpack.c.h.b16 %v149
    %v670 = vunpack.c.l.b16 %v150
    %v671 = vunpack.c.h.b16 %v150
    %v672 = vunpack.c.l.b16 %v151
    %v673 = vunpack.c.h.b16 %v151
    %v674 = vunpack.c.l.b16 %v152
    %v675 = vunpack.c.h.b16 %v152
    %v676 = vunpack.c.l.b16 %v153
    %v677 = vunpack.c.h.b16 %v153
    %v678 = vunpack.c.l.b16 %v154
    %v679 = vunpack.c.h.b16 %v154
    %v680 = vunpack.c.l.b16 %v155
    %v681 = vunpack.c.h.b16 %v155
    %v682 = vunpack.c.l.b16 %v156
    %v683 = vunpack.c.h.b16 %v156
    %v684 = vunpack.c.l.b16 %v157
    %v685 = vunpack.c.h.b16 %v157
    %v686 = vunpack.c.l.b16 %v158
    %v687 = vunpack.c.h.b16 %v158
    %v688 = vunpack.c.l.b16 %v159
    %v689 = vunpack.c.h.b16 %v159
    %v690 = vunpack.c.l.b16 %v160
    %v691 = vunpack.c.h.b16 %v160
    %v692 = vunpack.c.l.b16 %v161
    %v693 = vunpack.c.h.b16 %v161
    %v694 = vunpack.c.l.b16 %v162
    %v695 = vunpack.c.h.b16 %v162
    %v696 = vunpack.c.l.b16 %v163
    %v697 = vunpack.c.h.b16 %v163
    %v698 = vunpack.c.l.b16 %v164
    %v699 = vunpack.c.h.b16 %v164
    %v700 = vunpack.c.l.b16 %v165
    %v701 = vunpack.c.h.b16 %v165
    %v702 = vunpack.c.l.b16 %v166
    %v703 = vunpack.c.h.b16 %v166
    %v704 = vunpack.c.l.b16 %v167
    %v705 = vunpack.c.h.b16 %v167
    %v706 = vunpack.c.l.b16 %v168
    %v707 = vunpack.c.h.b16 %v168
    %v708 = vunpack.c.l.b16 %v169
    %v709 = vunpack.c.h.b16 %v169
    %v710 = vunpack.c.l.b16 %v170
    %v711 = vunpack.c.h.b16 %v170
    %v712 = vunpack.c.l.b16 %v171
    %v713 = vunpack.c.h.b16 %v171
    %v714 = vunpack.c.l.b16 %v172
    %v715 = vunpack.c.h.b16 %v172
    %v716 = vunpack.c.l.b16 %v173
    %v717 = vunpack.c.h.b16 %v173
    %v718 = vunpack.c.l.b16 %v174
    %v719 = vunpack.c.h.b16 %v174
    %v720 = vunpack.c.l.b16 %v175
    %v721 = vunpack.c.h.b16 %v175
    %v722 = vunpack.c.l.b16 %v176
    %v723 = vunpack.c.h.b16 %v176
    %v724 = vunpack.c.l.b16 %v177
    %v725 = vunpack.c.h.b16 %v177
    %v726 = vunpack.c.l.b16 %v178
    %v727 = vunpack.c.h.b16 %v178
    %v728 = vunpack.c.l.b16 %v179
    %v729 = vunpack.c.h.b16 %v179
    %v730 = vunpack.c.l.b16 %v180
    %v731 = vunpack.c.h.b16 %v180
    %v732 = vunpack.c.l.b16 %v181
    %v733 = vunpack.c.h.b16 %v181
    %v734 = vunpack.c.l.b16 %v182
    %v735 = vunpack.c.h.b16 %v182
    %v736 = vunpack.c.l.b16 %v183
    %v737 = vunpack.c.h.b16 %v183
    %v738 = vunpack.c.l.b16 %v184
    %v739 = vunpack.c.h.b16 %v184
    %v740 = vunpack.c.l.b16 %v185
    %v741 = vunpack.c.h.b16 %v185
    %v742 = vunpack.c.l.b16 %v186
    %v743 = vunpack.c.h.b16 %v186
    %v744 = vunpack.c.l.b16 %v187
    %v745 = vunpack.c.h.b16 %v187
    %v746 = vunpack.c.l.b16 %v188
    %v747 = vunpack.c.h.b16 %v188
    %v748 = vunpack.c.l.b16 %v189
    %v749 = vunpack.c.h.b16 %v189
    %v750 = vunpack.c.l.b16 %v190
    %v751 = vunpack.c.h.b16 %v190
    %v752 = vunpack.c.l.b16 %v191
    %v753 = vunpack.c.h.b16 %v191
    %v754 = vunpack.c.l.b16 %v192
    %v755 = vunpack.c.h.b16 %v192
    %v756 = vunpack.c.l.b16 %v193
    %v757 = vunpack.c.h.b16 %v193
    %v758 = vunpack.c.l.b16 %v194
    %v759 = vunpack.c.h.b16 %v194
    %v760 = vunpack.c.l.b16 %v195
    %v761 = vunpack.c.h.b16 %v195
    %v762 = vunpack.c.l.b16 %v196
    %v763 = vunpack.c.h.b16 %v196
    %v764 = vunpack.c.l.b16 %v197
    %v765 = vunpack.c.h.b16 %v197
    %v766 = vunpack.c.l.b16 %v198
    %v767 = vunpack.c.h.b16 %v198
    %v768 = vunpack.c.l.b16 %v199
    %v769 = vunpack.c.h.b16 %v199
    %v770 = vunpack.c.l.b16 %v200
    %v771 = vunpack.c.h.b16 %v200
    %v772 = vunpack.c.l.b16 %v201
    %v773 = vunpack.c.h.b16 %v201
    %v774 = vunpack.c.l.b16 %v202
    %v775 = vunpack.c.h.b16 %v202
    %v776 = vunpack.c.l.b16 %v203
    %v777 = vunpack.c.h.b16 %v203
    %v778 = vunpack.c.l.b16 %v204
    %v779 = vunpack.c.h.b16 %v204
    %v780 = vunpack.c.l.b16 %v205
    %v781 = vunpack.c.h.b16 %v205
    %v782 = vunpack.c.l.b16 %v206
    %v783 = vunpack.c.h.b16 %v206
    %v784 = vunpack.c.l.b16 %v207
    %v785 = vunpack.c.h.b16 %v207
    %v786 = vunpack.c.l.b16 %v208
    %v787 = vunpack.c.h.b16 %v208
    %v788 = vunpack.c.l.b16 %v209
    %v789 = vunpack.c.h.b16 %v209
    %v790 = vunpack.c.l.b16 %v210
    %v791 = vunpack.c.h.b16 %v210
    %v792 = vunpack.c.l.b16 %v211
    %v793 = vunpack.c.h.b16 %v211
    %v794 = vunpack.c.l.b16 %v212
    %v795 = vunpack.c.h.b16 %v212
    %v796 = vunpack.c.l.b16 %v213
    %v797 = vunpack.c.h.b16 %v213
    %v798 = vunpack.c.l.b16 %v214
    %v799 = vunpack.c.h.b16 %v214
    %v800 = vunpack.c.l.b16 %v215
    %v801 = vunpack.c.h.b16 %v215
    %v802 = vunpack.c.l.b16 %v216
    %v803 = vunpack.c.h.b16 %v216
    %v804 = vunpack.c.l.b16 %v217
    %v805 = vunpack.c.h.b16 %v217
    %v806 = vunpack.c.l.b16 %v218
    %v807 = vunpack.c.h.b16 %v218
    %v808 = vunpack.c.l.b16 %v219
    %v809 = vunpack.c.h.b16 %v219
    %v810 = vunpack.c.l.b16 %v220
    %v811 = vunpack.c.h.b16 %v220
    %v812 = vunpack.c.l.b16 %v221
    %v813 = vunpack.c.h.b16 %v221
    %v814 = vunpack.c.l.b16 %v222
    %v815 = vunpack.c.h.b16 %v222
    %v816 = vunpack.c.l.b16 %v223
    %v817 = vunpack.c.h.b16 %v223
    %v818 = vunpack.c.l.b16 %v224
    %v819 = vunpack.c.h.b16 %v224
    %v820 = vunpack.c.l.b16 %v225
    %v821 = vunpack.c.h.b16 %v225
    %v822 = vunpack.c.l.b16 %v226
    %v823 = vunpack.c.h.b16 %v226
    %v824 = vunpack.c.l.b16 %v227
    %v825 = vunpack.c.h.b16 %v227
    %v826 = vunpack.c.l.b16 %v228
    %v827 = vunpack.c.h.b16 %v228
    %v828 = vunpack.c.l.b16 %v229
    %v829 = vunpack.c.h.b16 %v229
    %v830 = vunpack.c.l.b16 %v230
    %v831 = vunpack.c.h.b16 %v230
    %v832 = vunpack.c.l.b16 %v231
    %v833 = vunpack.c.h.b16 %v231
    %v834 = vunpack.c.l.b16 %v232
    %v835 = vunpack.c.h.b16 %v232
    %v836 = vunpack.c.l.b16 %v233
    %v837 = vunpack.c.h.b16 %v233
    %v838 = vunpack.c.l.b16 %v234
    %v839 = vunpack.c.h.b16 %v234
    %v840 = vunpack.c.l.b16 %v235
    %v841 = vunpack.c.h.b16 %v235
    %v842 = vunpack.c.l.b16 %v236
    %v843 = vunpack.c.h.b16 %v236
    %v844 = vunpack.c.l.b16 %v237
    %v845 = vunpack.c.h.b16 %v237
    %v846 = vunpack.c.l.b16 %v238
    %v847 = vunpack.c.h.b16 %v238
    %v848 = vunpack.c.l.b16 %v239
    %v849 = vunpack.c.h.b16 %v239
    %v850 = vunpack.c.l.b16 %v240
    %v851 = vunpack.c.h.b16 %v240
    %v852 = vunpack.c.l.b16 %v241
    %v853 = vunpack.c.h.b16 %v241
    %v854 = vunpack.c.l.b16 %v242
    %v855 = vunpack.c.h.b16 %v242
    %v856 = vunpack.c.l.b16 %v243
    %v857 = vunpack.c.h.b16 %v243
    %v858 = vunpack.c.l.b16 %v244
    %v859 = vunpack.c.h.b16 %v244
    %v860 = vunpack.c.l.b16 %v245
    %v861 = vunpack.c.h.b16 %v245
    %v862 = vunpack.c.l.b16 %v246
    %v863 = vunpack.c.h.b16 %v246
    %v864 = vunpack.c.l.b16 %v247
    %v865 = vunpack.c.h.b16 %v247
    %v866 = vunpack.c.l.b16 %v248
    %v867 = vunpack.c.h.b16 %v248
    %v868 = vunpack.c.l.b16 %v249
    %v869 = vunpack.c.h.b16 %v249
    %v870 = vunpack.c.l.b16 %v250
    %v871 = vunpack.c.h.b16 %v250
    %v872 = vunpack.c.l.b16 %v251
    %v873 = vunpack.c.h.b16 %v251
    %v874 = vunpack.c.l.b16 %v252
    %v875 = vunpack.c.h.b16 %v252
    %v876 = vunpack.c.l.b16 %v253
    %v877 = vunpack.c.h.b16 %v253
    %v878 = vunpack.c.l.b16 %v254
    %v879 = vunpack.c.h.b16 %v254
    %v880 = vunpack.c.l.b16 %v255
    %v881 = vunpack.c.h.b16 %v255
    %v882 = vunpack.c.l.b16 %v256
    %v883 = vunpack.c.h.b16 %v256
    %v884 = vunpack.c.l.b16 %v257
    %v885 = vunpack.c.h.b16 %v257
    %v886 = vunpack.c.l.b16 %v258
    %v887 = vunpack.c.h.b16 %v258
    %v888 = vunpack.c.l.b16 %v259
    %v889 = vunpack.c.h.b16 %v259
    %v890 = vunpack.c.l.b16 %v260
    %v891 = vunpack.c.h.b16 %v260
    %v892 = vunpack.c.l.b16 %v261
    %v893 = vunpack.c.h.b16 %v261
    %v894 = vunpack.c.l.b16 %v262
    %v895 = vunpack.c.h.b16 %v262
    %v896 = vunpack.c.l.b16 %v263
    %v897 = vunpack.c.h.b16 %v263
    %v898 = vunpack.c.l.b16 %v264
    %v899 = vunpack.c.h.b16 %v264
    %v900 = vunpack.c.l.b16 %v265
    %v901 = vunpack.c.h.b16 %v265
    %v902 = vunpack.c.l.b16 %v266
    %v903 = vunpack.c.h.b16 %v266
    %v904 = vunpack.c.l.b16 %v267
    %v905 = vunpack.c.h.b16 %v267
    %v906 = vunpack.c.l.b16 %v268
    %v907 = vunpack.c.h.b16 %v268
    %v908 = vunpack.c.l.b16 %v269
    %v909 = vunpack.c.h.b16 %v269
    %v910 = vunpack.c.l.b16 %v270
    %v911 = vunpack.c.h.b16 %v270
    %v912 = vunpack.c.l.b16 %v271
    %v913 = vunpack.c.h.b16 %v271
    %v914 = vunpack.c.l.b16 %v272
    %v915 = vunpack.c.h.b16 %v272
    %v916 = vunpack.c.l.b16 %v273
    %v917 = vunpack.c.h.b16 %v273
    %v918 = vunpack.c.l.b16 %v274
    %v919 = vunpack.c.h.b16 %v274
    %v920 = vunpack.c.l.b16 %v275
    %v921 = vunpack.c.h.b16 %v275
    %v922 = vunpack.c.l.b16 %v276
    %v923 = vunpack.c.h.b16 %v276
    %v924 = vunpack.c.l.b16 %v277
    %v925 = vunpack.c.h.b16 %v277
    %v926 = vunpack.c.l.b16 %v278
    %v927 = vunpack.c.h.b16 %v278
    %v928 = vunpack.c.l.b16 %v279
    %v929 = vunpack.c.h.b16 %v279
    %v930 = vunpack.c.l.b16 %v280
    %v931 = vunpack.c.h.b16 %v280
    %v932 = vunpack.c.l.b16 %v281
    %v933 = vunpack.c.h.b16 %v281
    %v934 = vunpack.c.l.b16 %v282
    %v935 = vunpack.c.h.b16 %v282
    %v936 = vunpack.c.l.b16 %v283
    %v937 = vunpack.c.h.b16 %v283
    %v938 = vunpack.c.l.b16 %v284
    %v939 = vunpack.c.h.b16 %v284
    %v940 = vunpack.c.l.b16 %v285
    %v941 = vunpack.c.h.b16 %v285
    %v942 = vunpack.c.l.b16 %v286
    %v943 = vunpack.c.h.b16 %v286
    %v944 = vunpack.c.l.b16 %v287
    %v945 = vunpack.c.h.b16 %v287
    %v946 = vunpack.c.l.b16 %v288
    %v947 = vunpack.c.h.b16 %v288
    %v948 = vunpack.c.l.b16 %v289
    %v949 = vunpack.c.h.b16 %v289
    %v950 = vunpack.c.l.b16 %v290
    %v951 = vunpack.c.h.b16 %v290
    %v952 = vunpack.c.l.b16 %v291
    %v953 = vunpack.c.h.b16 %v291
    %v954 = vunpack.c.l.b16 %v292
    %v955 = vunpack.c.h.b16 %v292
    %v956 = vunpack.c.l.b16 %v293
    %v957 = vunpack.c.h.b16 %v293
    %v958 = vunpack.c.l.b16 %v294
    %v959 = vunpack.c.h.b16 %v294
    %v960 = vunpack.c.l.b16 %v295
    %v961 = vunpack.c.h.b16 %v295
    %v962 = vunpack.c.l.b16 %v296
    %v963 = vunpack.c.h.b16 %v296
    %v964 = vunpack.c.l.b16 %v297
    %v965 = vunpack.c.h.b16 %v297
    %v966 = vunpack.c.l.b16 %v298
    %v967 = vunpack.c.h.b16 %v298
    %v968 = vunpack.c.l.b16 %v299
    %v969 = vunpack.c.h.b16 %v299
    %v970 = vunpack.c.l.b16 %v300
    %v971 = vunpack.c.h.b16 %v300
    %v972 = vunpack.c.l.b16 %v301
    %v973 = vunpack.c.h.b16 %v301
    %v974 = vunpack.c.l.b16 %v302
    %v975 = vunpack.c.h.b16 %v302
    %v976 = vunpack.c.l.b16 %v303
    %v977 = vunpack.c.h.b16 %v303
    %v978 = vunpack.c.l.b16 %v304
    %v979 = vunpack.c.h.b16 %v304
    %v980 = vunpack.c.l.b16 %v305
    %v981 = vunpack.c.h.b16 %v305
    %v982 = vunpack.c.l.b16 %v306
    %v983 = vunpack.c.h.b16 %v306
    %v984 = vunpack.c.l.b16 %v307
    %v985 = vunpack.c.h.b16 %v307
    %v986 = vunpack.c.l.b16 %v308
    %v987 = vunpack.c.h.b16 %v308
    %v988 = vunpack.c.l.b16 %v309
    %v989 = vunpack.c.h.b16 %v309
    %v990 = vunpack.c.l.b16 %v310
    %v991 = vunpack.c.h.b16 %v310
    %v992 = vunpack.c.l.b16 %v311
    %v993 = vunpack.c.h.b16 %v311
    %v994 = vpack.c.b16 %v550, %v546
    %v995 = vpack.c.b16 %v551, %v547
    %v996 = vpack.c.b16 %v552, %v548
    %v997 = vpack.c.b16 %v553, %v549
    %v998 = vpack.c.b16 %v558, %v554
    %v999 = vpack.c.b16 %v559, %v555
    %v1000 = vpack.c.b16 %v560, %v556
    %v1001 = vpack.c.b16 %v561, %v557
    %v1002 = vpack.c.b16 %v566, %v562
    %v1003 = vpack.c.b16 %v567, %v563
    %v1004 = vpack.c.b16 %v568, %v564
    %v1005 = vpack.c.b16 %v569, %v565
    %v1006 = vpack.c.b16 %v574, %v570
    %v1007 = vpack.c.b16 %v575, %v571
    %v1008 = vpack.c.b16 %v576, %v572
    %v1009 = vpack.c.b16 %v577, %v573
    %v1010 = vpack.c.b16 %v582, %v578
    %v1011 = vpack.c.b16 %v583, %v579
    %v1012 = vpack.c.b16 %v584, %v580
    %v1013 = vpack.c.b16 %v585, %v581
    %v1014 = vpack.c.b16 %v590, %v586
    %v1015 = vpack.c.b16 %v591, %v587
    %v1016 = vpack.c.b16 %v592, %v588
    %v1017 = vpack.c.b16 %v593, %v589
    %v1018 = vpack.c.b16 %v598, %v594
    %v1019 = vpack.c.b16 %v599, %v595
    %v1020 = vpack.c.b16 %v600, %v596
    %v1021 = vpack.c.b16 %v601, %v597
    %v1022 = vpack.c.b16 %v606, %v602
    %v1023 = vpack.c.b16 %v607, %v603
    %v1024 = vpack.c.b16 %v608, %v604
    %v1025 = vpack.c.b16 %v609, %v605
    %v1026 = vpack.c.b16 %v614, %v610
    %v1027 = vpack.c.b16 %v615, %v611
    %v1028 = vpack.c.b16 %v616, %v612
    %v1029 = vpack.c.b16 %v617, %v613
    %v1030 = vpack.c.b16 %v622, %v618
    %v1031 = vpack.c.b16 %v623, %v619
    %v1032 = vpack.c.b16 %v624, %v620
    %v1033 = vpack.c.b16 %v625, %v621
    %v1034 = vpack.c.b16 %v630, %v626
    %v1035 = vpack.c.b16 %v631, %v627
    %v1036 = vpack.c.b16 %v632, %v628
    %v1037 = vpack.c.b16 %v633, %v629
    %v1038 = vpack.c.b16 %v638, %v634
    %v1039 = vpack.c.b16 %v639, %v635
    %v1040 = vpack.c.b16 %v640, %v636
    %v1041 = vpack.c.b16 %v641, %v637
    %v1042 = vpack.c.b16 %v646, %v642
    %v1043 = vpack.c.b16 %v647, %v643
    %v1044 = vpack.c.b16 %v648, %v644
    %v1045 = vpack.c.b16 %v649, %v645
    %v1046 = vpack.c.b16 %v654, %v650
    %v1047 = vpack.c.b16 %v655, %v651
    %v1048 = vpack.c.b16 %v656, %v652
    %v1049 = vpack.c.b16 %v657, %v653
    %v1050 = vpack.c.b16 %v662, %v658
    %v1051 = vpack.c.b16 %v663, %v659
    %v1052 = vpack.c.b16 %v664, %v660
    %v1053 = vpack.c.b16 %v665, %v661
    %v1054 = vpack.c.b16 %v670, %v666
    %v1055 = vpack.c.b16 %v671, %v667
    %v1056 = vpack.c.b16 %v672, %v668
    %v1057 = vpack.c.b16 %v673, %v669
    %v1058 = vpack.c.b16 %v678, %v674
    %v1059 = vpack.c.b16 %v679, %v675
    %v1060 = vpack.c.b16 %v680, %v676
    %v1061 = vpack.c.b16 %v681, %v677
    %v1062 = vpack.c.b16 %v686, %v682
    %v1063 = vpack.c.b16 %v687, %v683
    %v1064 = vpack.c.b16 %v688, %v684
    %v1065 = vpack.c.b16 %v689, %v685
    %v1066 = vpack.c.b16 %v694, %v690
    %v1067 = vpack.c.b16 %v695, %v691
    %v1068 = vpack.c.b16 %v696, %v692
    %v1069 = vpack.c.b16 %v697, %v693
    %v1070 = vpack.c.b16 %v702, %v698
    %v1071 = vpack.c.b16 %v703, %v699
    %v1072 = vpack.c.b16 %v704, %v700
    %v1073 = vpack.c.b16 %v705, %v701
    %v1074 = vpack.c.b16 %v710, %v706
    %v1075 = vpack.c.b16 %v711, %v707
    %v1076 = vpack.c.b16 %v712, %v708
    %v1077 = vpack.c.b16 %v713, %v709
    %v1078 = vpack.c.b16 %v718, %v714
    %v1079 = vpack.c.b16 %v719, %v715
    %v1080 = vpack.c.b16 %v720, %v716
    %v1081 = vpack.c.b16 %v721, %v717
    %v1082 = vpack.c.b16 %v726, %v722
    %v1083 = vpack.c.b16 %v727, %v723
    %v1084 = vpack.c.b16 %v728, %v724
    %v1085 = vpack.c.b16 %v729, %v725
    %v1086 = vpack.c.b16 %v734, %v730
    %v1087 = vpack.c.b16 %v735, %v731
    %v1088 = vpack.c.b16 %v736, %v732
    %v1089 = vpack.c.b16 %v737, %v733
    %v1090 = vpack.c.b16 %v742, %v738
    %v1091 = vpack.c.b16 %v743, %v739
    %v1092 = vpack.c.b16 %v744, %v740
    %v1093 = vpack.c.b16 %v745, %v741
    %v1094 = vpack.c.b16 %v750, %v746
    %v1095 = vpack.c.b16 %v751, %v747
    %v1096 = vpack.c.b16 %v752, %v748
    %v1097 = vpack.c.b16 %v753, %v749
    %v1098 = vpack.c.b16 %v758, %v754
    %v1099 = vpack.c.b16 %v759, %v755
    %v1100 = vpack.c.b16 %v760, %v756
    %v1101 = vpack.c.b16 %v761, %v757
    %v1102 = vpack.c.b16 %v766, %v762
    %v1103 = vpack.c.b16 %v767, %v763
    %v1104 = vpack.c.b16 %v768, %v764
    %v1105 = vpack.c.b16 %v769, %v765
    %v1106 = vpack.c.b16 %v774, %v770
    %v1107 = vpack.c.b16 %v775, %v771
    %v1108 = vpack.c.b16 %v776, %v772
    %v1109 = vpack.c.b16 %v777, %v773
    %v1110 = vpack.c.b16 %v782, %v778
    %v1111 = vpack.c.b16 %v783, %v779
    %v1112 = vpack.c.b16 %v784, %v780
    %v1113 = vpack.c.b16 %v785, %v781
    %v1114 = vpack.c.b16 %v790, %v786
    %v1115 = vpack.c.b16 %v791, %v787
    %v1116 = vpack.c.b16 %v792, %v788
    %v1117 = vpack.c.b16 %v793, %v789
    %v1118 = vpack.c.b16 %v798, %v794
    %v1119 = vpack.c.b16 %v799, %v795
    %v1120 = vpack.c.b16 %v800, %v796
    %v1121 = vpack.c.b16 %v801, %v797
    %v1122 = vpack.c.b16 %v806, %v802
    %v1123 = vpack.c.b16 %v807, %v803
    %v1124 = vpack.c.b16 %v808, %v804
    %v1125 = vpack.c.b16 %v809, %v805
    %v1126 = vpack.c.b16 %v814, %v810
    %v1127 = vpack.c.b16 %v815, %v811
    %v1128 = vpack.c.b16 %v816, %v812
    %v1129 = vpack.c.b16 %v817, %v813
    %v1130 = vpack.c.b16 %v822, %v818
    %v1131 = vpack.c.b16 %v823, %v819
    %v1132 = vpack.c.b16 %v824, %v820
    %v1133 = vpack.c.b16 %v825, %v821
    %v1134 = vpack.c.b16 %v830, %v826
    %v1135 = vpack.c.b16 %v831, %v827
    %v1136 = vpack.c.b16 %v832, %v828
    %v1137 = vpack.c.b16 %v833, %v829
    %v1138 = vpack.c.b16 %v838, %v834
    %v1139 = vpack.c.b16 %v839, %v835
    %v1140 = vpack.c.b16 %v840, %v836
    %v1141 = vpack.c.b16 %v841, %v837
    %v1142 = vpack.c.b16 %v846, %v842
    %v1143 = vpack.c.b16 %v847, %v843
    %v1144 = vpack.c.b16 %v848, %v844
    %v1145 = vpack.c.b16 %v849, %v845
    %v1146 = vpack.c.b16 %v854, %v850
    %v1147 = vpack.c.b16 %v855, %v851
    %v1148 = vpack.c.b16 %v856, %v852
    %v1149 = vpack.c.b16 %v857, %v853
    %v1150 = vpack.c.b16 %v862, %v858
    %v1151 = vpack.c.b16 %v863, %v859
    %v1152 = vpack.c.b16 %v864, %v860
    %v1153 = vpack.c.b16 %v865, %v861
    %v1154 = vpack.c.b16 %v870, %v866
    %v1155 = vpack.c.b16 %v871, %v867
    %v1156 = vpack.c.b16 %v872, %v868
    %v1157 = vpack.c.b16 %v873, %v869
    %v1158 = vpack.c.b16 %v878, %v874
    %v1159 = vpack.c.b16 %v879, %v875
    %v1160 = vpack.c.b16 %v880, %v876
    %v1161 = vpack.c.b16 %v881, %v877
    %v1162 = vpack.c.b16 %v886, %v882
    %v1163 = vpack.c.b16 %v887, %v883
    %v1164 = vpack.c.b16 %v888, %v884
    %v1165 = vpack.c.b16 %v889, %v885
    %v1166 = vpack.c.b16 %v894, %v890
    %v1167 = vpack.c.b16 %v895, %v891
    %v1168 = vpack.c.b16 %v896, %v892
    %v1169 = vpack.c.b16 %v897, %v893
    %v1170 = vpack.c.b16 %v902, %v898
    %v1171 = vpack.c.b16 %v903, %v899
    %v1172 = vpack.c.b16 %v904, %v900
    %v1173 = vpack.c.b16 %v905, %v901
    %v1174 = vpack.c.b16 %v910, %v906
    %v1175 = vpack.c.b16 %v911, %v907
    %v1176 = vpack.c.b16 %v912, %v908
    %v1177 = vpack.c.b16 %v913, %v909
    %v1178 = vpack.c.b16 %v918, %v914
    %v1179 = vpack.c.b16 %v919, %v915
    %v1180 = vpack.c.b16 %v920, %v916
    %v1181 = vpack.c.b16 %v921, %v917
    %v1182 = vpack.c.b16 %v926, %v922
    %v1183 = vpack.c.b16 %v927, %v923
    %v1184 = vpack.c.b16 %v928, %v924
    %v1185 = vpack.c.b16 %v929, %v925
    %v1186 = vpack.c.b16 %v934, %v930
    %v1187 = vpack.c.b16 %v935, %v931
    %v1188 = vpack.c.b16 %v936, %v932
    %v1189 = vpack.c.b16 %v937, %v933
    %v1190 = vpack.c.b16 %v942, %v938
    %v1191 = vpack.c.b16 %v943, %v939
    %v1192 = vpack.c.b16 %v944, %v940
    %v1193 = vpack.c.b16 %v945, %v941
    %v1194 = vpack.c.b16 %v950, %v946
    %v1195 = vpack.c.b16 %v951, %v947
    %v1196 = vpack.c.b16 %v952, %v948
    %v1197 = vpack.c.b16 %v953, %v949
    %v1198 = vpack.c.b16 %v958, %v954
    %v1199 = vpack.c.b16 %v959, %v955
    %v1200 = vpack.c.b16 %v960, %v956
    %v1201 = vpack.c.b16 %v961, %v957
    %v1202 = vpack.c.b16 %v966, %v962
    %v1203 = vpack.c.b16 %v967, %v963
    %v1204 = vpack.c.b16 %v968, %v964
    %v1205 = vpack.c.b16 %v969, %v965
    %v1206 = vpack.c.b16 %v974, %v970
    %v1207 = vpack.c.b16 %v975, %v971
    %v1208 = vpack.c.b16 %v976, %v972
    %v1209 = vpack.c.b16 %v977, %v973
    %v1210 = vpack.c.b16 %v982, %v978
    %v1211 = vpack.c.b16 %v983, %v979
    %v1212 = vpack.c.b16 %v984, %v980
    %v1213 = vpack.c.b16 %v985, %v981
    %v1214 = vpack.c.b16 %v990, %v986
    %v1215 = vpack.c.b16 %v991, %v987
    %v1216 = vpack.c.b16 %v992, %v988
    %v1217 = vpack.c.b16 %v993, %v989
    %1442 = vmatpush.bf16.msra.mxu0 %v1022
    %1443 = vmatpush.bf16.msra.mxu0 %v1018
    %1444 = vmatpush.bf16.msra.mxu0 %v1014
    %1445 = vmatpush.bf16.msra.mxu0 %v1010
    %1446 = vmatpush.bf16.msra.mxu0 %v1006
    %1447 = vmatpush.bf16.msra.mxu0 %v1002
    %1448 = vmatpush.bf16.msra.mxu0 %v998
    %1449 = vmatpush.bf16.msra.mxu0 %v994
    %1450 = vmatmul.bf16.gmra.mxu0 %v81
    %v1451 = vpop.f32.mrf.mxu0
    %v1452 = vadd.f32 %v314, %v1451
    %v1453 = vpop.f32.mrf.mxu0
    %1454 = vdwg.mxu0
    %1455 = vmatpush.bf16.msra.mxu0 %v1054
    %1456 = vmatpush.bf16.msra.mxu0 %v1050
    %1457 = vmatpush.bf16.msra.mxu0 %v1046
    %1458 = vmatpush.bf16.msra.mxu0 %v1042
    %1459 = vmatpush.bf16.msra.mxu0 %v1038
    %1460 = vmatpush.bf16.msra.mxu0 %v1034
    %1461 = vmatpush.bf16.msra.mxu0 %v1030
    %1462 = vmatpush.bf16.msra.mxu0 %v1026
    %1463 = vmatmul.bf16.gmra.mxu0 %v82
    %v1464 = vpop.f32.mrf.mxu0
    %v1465 = vadd.f32 %v1452, %v1464
    %v1466 = vpop.f32.mrf.mxu0
    %1467 = vdwg.mxu0
    %1468 = vmatpush.bf16.msra.mxu0 %v1086
    %1469 = vmatpush.bf16.msra.mxu0 %v1082
    %1470 = vmatpush.bf16.msra.mxu0 %v1078
    %1471 = vmatpush.bf16.msra.mxu0 %v1074
    %1472 = vmatpush.bf16.msra.mxu0 %v1070
    %1473 = vmatpush.bf16.msra.mxu0 %v1066
    %1474 = vmatpush.bf16.msra.mxu0 %v1062
    %1475 = vmatpush.bf16.msra.mxu0 %v1058
    %1476 = vmatmul.bf16.gmra.mxu0 %v83
    %v1477 = vpop.f32.mrf.mxu0
    %v1478 = vadd.f32 %v1465, %v1477
    %v1479 = vpop.f32.mrf.mxu0
    %1480 = vdwg.mxu0
    %1481 = vmatpush.bf16.msra.mxu0 %v1118
    %1482 = vmatpush.bf16.msra.mxu0 %v1114
    %1483 = vmatpush.bf16.msra.mxu0 %v1110
    %1484 = vmatpush.bf16.msra.mxu0 %v1106
    %1485 = vmatpush.bf16.msra.mxu0 %v1102
    %1486 = vmatpush.bf16.msra.mxu0 %v1098
    %1487 = vmatpush.bf16.msra.mxu0 %v1094
    %1488 = vmatpush.bf16.msra.mxu0 %v1090
    %1489 = vmatmul.bf16.gmra.mxu0 %v84
    %v1490 = vpop.f32.mrf.mxu0
    %v1491 = vadd.f32 %v1478, %v1490
    %v1492 = vpop.f32.mrf.mxu0
    %1493 = vdwg.mxu0
    %1494 = vmatpush.bf16.msra.mxu0 %v1150
    %1495 = vmatpush.bf16.msra.mxu0 %v1146
    %1496 = vmatpush.bf16.msra.mxu0 %v1142
    %1497 = vmatpush.bf16.msra.mxu0 %v1138
    %1498 = vmatpush.bf16.msra.mxu0 %v1134
    %1499 = vmatpush.bf16.msra.mxu0 %v1130
    %1500 = vmatpush.bf16.msra.mxu0 %v1126
    %1501 = vmatpush.bf16.msra.mxu0 %v1122
    %1502 = vmatmul.bf16.gmra.mxu0 %v85
    %v1503 = vpop.f32.mrf.mxu0
    %v1504 = vadd.f32 %v1491, %v1503
    %v1505 = vpop.f32.mrf.mxu0
    %1506 = vdwg.mxu0
    %1507 = vmatpush.bf16.msra.mxu0 %v1182
    %1508 = vmatpush.bf16.msra.mxu0 %v1178
    %1509 = vmatpush.bf16.msra.mxu0 %v1174
    %1510 = vmatpush.bf16.msra.mxu0 %v1170
    %1511 = vmatpush.bf16.msra.mxu0 %v1166
    %1512 = vmatpush.bf16.msra.mxu0 %v1162
    %1513 = vmatpush.bf16.msra.mxu0 %v1158
    %1514 = vmatpush.bf16.msra.mxu0 %v1154
    %1515 = vmatmul.bf16.gmra.mxu0 %v86
    %v1516 = vpop.f32.mrf.mxu0
    %v1517 = vadd.f32 %v1504, %v1516
    %v1518 = vpop.f32.mrf.mxu0
    %1519 = vdwg.mxu0
    %1520 = vmatpush.bf16.msra.mxu0 %v1214
    %1521 = vmatpush.bf16.msra.mxu0 %v1210
    %1522 = vmatpush.bf16.msra.mxu0 %v1206
    %1523 = vmatpush.bf16.msra.mxu0 %v1202
    %1524 = vmatpush.bf16.msra.mxu0 %v1198
    %1525 = vmatpush.bf16.msra.mxu0 %v1194
    %1526 = vmatpush.bf16.msra.mxu0 %v1190
    %1527 = vmatpush.bf16.msra.mxu0 %v1186
    %1528 = vmatmul.bf16.gmra.mxu0 %v87
    %v1529 = vpop.f32.mrf.mxu0
    %v1530 = vadd.f32 %v1517, %v1529
    %v1531 = vpop.f32.mrf.mxu0
    %1532 = vdwg.mxu0
    %1533 = vmatpush.bf16.msra.mxu0 %v1023
    %1534 = vmatpush.bf16.msra.mxu0 %v1019
    %1535 = vmatpush.bf16.msra.mxu0 %v1015
    %1536 = vmatpush.bf16.msra.mxu0 %v1011
    %1537 = vmatpush.bf16.msra.mxu0 %v1007
    %1538 = vmatpush.bf16.msra.mxu0 %v1003
    %1539 = vmatpush.bf16.msra.mxu0 %v999
    %1540 = vmatpush.bf16.msra.mxu0 %v995
    %1541 = vmatmul.bf16.gmra.mxu0 %v81
    %v1542 = vpop.f32.mrf.mxu0
    %v1543 = vadd.f32 %v315, %v1542
    %v1544 = vpop.f32.mrf.mxu0
    %1545 = vdwg.mxu0
    %1546 = vmatpush.bf16.msra.mxu0 %v1055
    %1547 = vmatpush.bf16.msra.mxu0 %v1051
    %1548 = vmatpush.bf16.msra.mxu0 %v1047
    %1549 = vmatpush.bf16.msra.mxu0 %v1043
    %1550 = vmatpush.bf16.msra.mxu0 %v1039
    %1551 = vmatpush.bf16.msra.mxu0 %v1035
    %1552 = vmatpush.bf16.msra.mxu0 %v1031
    %1553 = vmatpush.bf16.msra.mxu0 %v1027
    %1554 = vmatmul.bf16.gmra.mxu0 %v82
    %v1555 = vpop.f32.mrf.mxu0
    %v1556 = vadd.f32 %v1543, %v1555
    %v1557 = vpop.f32.mrf.mxu0
    %1558 = vdwg.mxu0
    %1559 = vmatpush.bf16.msra.mxu0 %v1087
    %1560 = vmatpush.bf16.msra.mxu0 %v1083
    %1561 = vmatpush.bf16.msra.mxu0 %v1079
    %1562 = vmatpush.bf16.msra.mxu0 %v1075
    %1563 = vmatpush.bf16.msra.mxu0 %v1071
    %1564 = vmatpush.bf16.msra.mxu0 %v1067
    %1565 = vmatpush.bf16.msra.mxu0 %v1063
    %1566 = vmatpush.bf16.msra.mxu0 %v1059
    %1567 = vmatmul.bf16.gmra.mxu0 %v83
    %v1568 = vpop.f32.mrf.mxu0
    %v1569 = vadd.f32 %v1556, %v1568
    %v1570 = vpop.f32.mrf.mxu0
    %1571 = vdwg.mxu0
    %1572 = vmatpush.bf16.msra.mxu0 %v1119
    %1573 = vmatpush.bf16.msra.mxu0 %v1115
    %1574 = vmatpush.bf16.msra.mxu0 %v1111
    %1575 = vmatpush.bf16.msra.mxu0 %v1107
    %1576 = vmatpush.bf16.msra.mxu0 %v1103
    %1577 = vmatpush.bf16.msra.mxu0 %v1099
    %1578 = vmatpush.bf16.msra.mxu0 %v1095
    %1579 = vmatpush.bf16.msra.mxu0 %v1091
    %1580 = vmatmul.bf16.gmra.mxu0 %v84
    %v1581 = vpop.f32.mrf.mxu0
    %v1582 = vadd.f32 %v1569, %v1581
    %v1583 = vpop.f32.mrf.mxu0
    %1584 = vdwg.mxu0
    %1585 = vmatpush.bf16.msra.mxu0 %v1151
    %1586 = vmatpush.bf16.msra.mxu0 %v1147
    %1587 = vmatpush.bf16.msra.mxu0 %v1143
    %1588 = vmatpush.bf16.msra.mxu0 %v1139
    %1589 = vmatpush.bf16.msra.mxu0 %v1135
    %1590 = vmatpush.bf16.msra.mxu0 %v1131
    %1591 = vmatpush.bf16.msra.mxu0 %v1127
    %1592 = vmatpush.bf16.msra.mxu0 %v1123
    %1593 = vmatmul.bf16.gmra.mxu0 %v85
    %v1594 = vpop.f32.mrf.mxu0
    %v1595 = vadd.f32 %v1582, %v1594
    %v1596 = vpop.f32.mrf.mxu0
    %1597 = vdwg.mxu0
    %1598 = vmatpush.bf16.msra.mxu0 %v1183
    %1599 = vmatpush.bf16.msra.mxu0 %v1179
    %1600 = vmatpush.bf16.msra.mxu0 %v1175
    %1601 = vmatpush.bf16.msra.mxu0 %v1171
    %1602 = vmatpush.bf16.msra.mxu0 %v1167
    %1603 = vmatpush.bf16.msra.mxu0 %v1163
    %1604 = vmatpush.bf16.msra.mxu0 %v1159
    %1605 = vmatpush.bf16.msra.mxu0 %v1155
    %1606 = vmatmul.bf16.gmra.mxu0 %v86
    %v1607 = vpop.f32.mrf.mxu0
    %v1608 = vadd.f32 %v1595, %v1607
    %v1609 = vpop.f32.mrf.mxu0
    %1610 = vdwg.mxu0
    %1611 = vmatpush.bf16.msra.mxu0 %v1215
    %1612 = vmatpush.bf16.msra.mxu0 %v1211
    %1613 = vmatpush.bf16.msra.mxu0 %v1207
    %1614 = vmatpush.bf16.msra.mxu0 %v1203
    %1615 = vmatpush.bf16.msra.mxu0 %v1199
    %1616 = vmatpush.bf16.msra.mxu0 %v1195
    %1617 = vmatpush.bf16.msra.mxu0 %v1191
    %1618 = vmatpush.bf16.msra.mxu0 %v1187
    %1619 = vmatmul.bf16.gmra.mxu0 %v87
    %v1620 = vpop.f32.mrf.mxu0
    %v1621 = vadd.f32 %v1608, %v1620
    %v1622 = vpop.f32.mrf.mxu0
    %1623 = vdwg.mxu0
    %1624 = vmatpush.bf16.msra.mxu0 %v1024
    %1625 = vmatpush.bf16.msra.mxu0 %v1020
    %1626 = vmatpush.bf16.msra.mxu0 %v1016
    %1627 = vmatpush.bf16.msra.mxu0 %v1012
    %1628 = vmatpush.bf16.msra.mxu0 %v1008
    %1629 = vmatpush.bf16.msra.mxu0 %v1004
    %1630 = vmatpush.bf16.msra.mxu0 %v1000
    %1631 = vmatpush.bf16.msra.mxu0 %v996
    %1632 = vmatmul.bf16.gmra.mxu0 %v81
    %v1633 = vpop.f32.mrf.mxu0
    %v1634 = vadd.f32 %v316, %v1633
    %v1635 = vpop.f32.mrf.mxu0
    %1636 = vdwg.mxu0
    %1637 = vmatpush.bf16.msra.mxu0 %v1056
    %1638 = vmatpush.bf16.msra.mxu0 %v1052
    %1639 = vmatpush.bf16.msra.mxu0 %v1048
    %1640 = vmatpush.bf16.msra.mxu0 %v1044
    %1641 = vmatpush.bf16.msra.mxu0 %v1040
    %1642 = vmatpush.bf16.msra.mxu0 %v1036
    %1643 = vmatpush.bf16.msra.mxu0 %v1032
    %1644 = vmatpush.bf16.msra.mxu0 %v1028
    %1645 = vmatmul.bf16.gmra.mxu0 %v82
    %v1646 = vpop.f32.mrf.mxu0
    %v1647 = vadd.f32 %v1634, %v1646
    %v1648 = vpop.f32.mrf.mxu0
    %1649 = vdwg.mxu0
    %1650 = vmatpush.bf16.msra.mxu0 %v1088
    %1651 = vmatpush.bf16.msra.mxu0 %v1084
    %1652 = vmatpush.bf16.msra.mxu0 %v1080
    %1653 = vmatpush.bf16.msra.mxu0 %v1076
    %1654 = vmatpush.bf16.msra.mxu0 %v1072
    %1655 = vmatpush.bf16.msra.mxu0 %v1068
    %1656 = vmatpush.bf16.msra.mxu0 %v1064
    %1657 = vmatpush.bf16.msra.mxu0 %v1060
    %1658 = vmatmul.bf16.gmra.mxu0 %v83
    %v1659 = vpop.f32.mrf.mxu0
    %v1660 = vadd.f32 %v1647, %v1659
    %v1661 = vpop.f32.mrf.mxu0
    %1662 = vdwg.mxu0
    %1663 = vmatpush.bf16.msra.mxu0 %v1120
    %1664 = vmatpush.bf16.msra.mxu0 %v1116
    %1665 = vmatpush.bf16.msra.mxu0 %v1112
    %1666 = vmatpush.bf16.msra.mxu0 %v1108
    %1667 = vmatpush.bf16.msra.mxu0 %v1104
    %1668 = vmatpush.bf16.msra.mxu0 %v1100
    %1669 = vmatpush.bf16.msra.mxu0 %v1096
    %1670 = vmatpush.bf16.msra.mxu0 %v1092
    %1671 = vmatmul.bf16.gmra.mxu0 %v84
    %v1672 = vpop.f32.mrf.mxu0
    %v1673 = vadd.f32 %v1660, %v1672
    %v1674 = vpop.f32.mrf.mxu0
    %1675 = vdwg.mxu0
    %1676 = vmatpush.bf16.msra.mxu0 %v1152
    %1677 = vmatpush.bf16.msra.mxu0 %v1148
    %1678 = vmatpush.bf16.msra.mxu0 %v1144
    %1679 = vmatpush.bf16.msra.mxu0 %v1140
    %1680 = vmatpush.bf16.msra.mxu0 %v1136
    %1681 = vmatpush.bf16.msra.mxu0 %v1132
    %1682 = vmatpush.bf16.msra.mxu0 %v1128
    %1683 = vmatpush.bf16.msra.mxu0 %v1124
    %1684 = vmatmul.bf16.gmra.mxu0 %v85
    %v1685 = vpop.f32.mrf.mxu0
    %v1686 = vadd.f32 %v1673, %v1685
    %v1687 = vpop.f32.mrf.mxu0
    %1688 = vdwg.mxu0
    %1689 = vmatpush.bf16.msra.mxu0 %v1184
    %1690 = vmatpush.bf16.msra.mxu0 %v1180
    %1691 = vmatpush.bf16.msra.mxu0 %v1176
    %1692 = vmatpush.bf16.msra.mxu0 %v1172
    %1693 = vmatpush.bf16.msra.mxu0 %v1168
    %1694 = vmatpush.bf16.msra.mxu0 %v1164
    %1695 = vmatpush.bf16.msra.mxu0 %v1160
    %1696 = vmatpush.bf16.msra.mxu0 %v1156
    %1697 = vmatmul.bf16.gmra.mxu0 %v86
    %v1698 = vpop.f32.mrf.mxu0
    %v1699 = vadd.f32 %v1686, %v1698
    %v1700 = vpop.f32.mrf.mxu0
    %1701 = vdwg.mxu0
    %1702 = vmatpush.bf16.msra.mxu0 %v1216
    %1703 = vmatpush.bf16.msra.mxu0 %v1212
    %1704 = vmatpush.bf16.msra.mxu0 %v1208
    %1705 = vmatpush.bf16.msra.mxu0 %v1204
    %1706 = vmatpush.bf16.msra.mxu0 %v1200
    %1707 = vmatpush.bf16.msra.mxu0 %v1196
    %1708 = vmatpush.bf16.msra.mxu0 %v1192
    %1709 = vmatpush.bf16.msra.mxu0 %v1188
    %1710 = vmatmul.bf16.gmra.mxu0 %v87
    %v1711 = vpop.f32.mrf.mxu0
    %v1712 = vadd.f32 %v1699, %v1711
    %v1713 = vpop.f32.mrf.mxu0
    %1714 = vdwg.mxu0
    %1715 = vmatpush.bf16.msra.mxu0 %v1025
    %1716 = vmatpush.bf16.msra.mxu0 %v1021
    %1717 = vmatpush.bf16.msra.mxu0 %v1017
    %1718 = vmatpush.bf16.msra.mxu0 %v1013
    %1719 = vmatpush.bf16.msra.mxu0 %v1009
    %1720 = vmatpush.bf16.msra.mxu0 %v1005
    %1721 = vmatpush.bf16.msra.mxu0 %v1001
    %1722 = vmatpush.bf16.msra.mxu0 %v997
    %1723 = vmatmul.bf16.gmra.mxu0 %v81
    %v1724 = vpop.f32.mrf.mxu0
    %v1725 = vadd.f32 %v317, %v1724
    %v1726 = vpop.f32.mrf.mxu0
    %1727 = vdwg.mxu0
    %1728 = vmatpush.bf16.msra.mxu0 %v1057
    %1729 = vmatpush.bf16.msra.mxu0 %v1053
    %1730 = vmatpush.bf16.msra.mxu0 %v1049
    %1731 = vmatpush.bf16.msra.mxu0 %v1045
    %1732 = vmatpush.bf16.msra.mxu0 %v1041
    %1733 = vmatpush.bf16.msra.mxu0 %v1037
    %1734 = vmatpush.bf16.msra.mxu0 %v1033
    %1735 = vmatpush.bf16.msra.mxu0 %v1029
    %1736 = vmatmul.bf16.gmra.mxu0 %v82
    %v1737 = vpop.f32.mrf.mxu0
    %v1738 = vadd.f32 %v1725, %v1737
    %v1739 = vpop.f32.mrf.mxu0
    %1740 = vdwg.mxu0
    %1741 = vmatpush.bf16.msra.mxu0 %v1089
    %1742 = vmatpush.bf16.msra.mxu0 %v1085
    %1743 = vmatpush.bf16.msra.mxu0 %v1081
    %1744 = vmatpush.bf16.msra.mxu0 %v1077
    %1745 = vmatpush.bf16.msra.mxu0 %v1073
    %1746 = vmatpush.bf16.msra.mxu0 %v1069
    %1747 = vmatpush.bf16.msra.mxu0 %v1065
    %1748 = vmatpush.bf16.msra.mxu0 %v1061
    %1749 = vmatmul.bf16.gmra.mxu0 %v83
    %v1750 = vpop.f32.mrf.mxu0
    %v1751 = vadd.f32 %v1738, %v1750
    %v1752 = vpop.f32.mrf.mxu0
    %1753 = vdwg.mxu0
    %1754 = vmatpush.bf16.msra.mxu0 %v1121
    %1755 = vmatpush.bf16.msra.mxu0 %v1117
    %1756 = vmatpush.bf16.msra.mxu0 %v1113
    %1757 = vmatpush.bf16.msra.mxu0 %v1109
    %1758 = vmatpush.bf16.msra.mxu0 %v1105
    %1759 = vmatpush.bf16.msra.mxu0 %v1101
    %1760 = vmatpush.bf16.msra.mxu0 %v1097
    %1761 = vmatpush.bf16.msra.mxu0 %v1093
    %1762 = vmatmul.bf16.gmra.mxu0 %v84
    %v1763 = vpop.f32.mrf.mxu0
    %v1764 = vadd.f32 %v1751, %v1763
    %v1765 = vpop.f32.mrf.mxu0
    %1766 = vdwg.mxu0
    %1767 = vmatpush.bf16.msra.mxu0 %v1153
    %1768 = vmatpush.bf16.msra.mxu0 %v1149
    %1769 = vmatpush.bf16.msra.mxu0 %v1145
    %1770 = vmatpush.bf16.msra.mxu0 %v1141
    %1771 = vmatpush.bf16.msra.mxu0 %v1137
    %1772 = vmatpush.bf16.msra.mxu0 %v1133
    %1773 = vmatpush.bf16.msra.mxu0 %v1129
    %1774 = vmatpush.bf16.msra.mxu0 %v1125
    %1775 = vmatmul.bf16.gmra.mxu0 %v85
    %v1776 = vpop.f32.mrf.mxu0
    %v1777 = vadd.f32 %v1764, %v1776
    %v1778 = vpop.f32.mrf.mxu0
    %1779 = vdwg.mxu0
    %1780 = vmatpush.bf16.msra.mxu0 %v1185
    %1781 = vmatpush.bf16.msra.mxu0 %v1181
    %1782 = vmatpush.bf16.msra.mxu0 %v1177
    %1783 = vmatpush.bf16.msra.mxu0 %v1173
    %1784 = vmatpush.bf16.msra.mxu0 %v1169
    %1785 = vmatpush.bf16.msra.mxu0 %v1165
    %1786 = vmatpush.bf16.msra.mxu0 %v1161
    %1787 = vmatpush.bf16.msra.mxu0 %v1157
    %1788 = vmatmul.bf16.gmra.mxu0 %v86
    %v1789 = vpop.f32.mrf.mxu0
    %v1790 = vadd.f32 %v1777, %v1789
    %v1791 = vpop.f32.mrf.mxu0
    %1792 = vdwg.mxu0
    %1793 = vmatpush.bf16.msra.mxu0 %v1217
    %1794 = vmatpush.bf16.msra.mxu0 %v1213
    %1795 = vmatpush.bf16.msra.mxu0 %v1209
    %1796 = vmatpush.bf16.msra.mxu0 %v1205
    %1797 = vmatpush.bf16.msra.mxu0 %v1201
    %1798 = vmatpush.bf16.msra.mxu0 %v1197
    %1799 = vmatpush.bf16.msra.mxu0 %v1193
    %1800 = vmatpush.bf16.msra.mxu0 %v1189
    %1801 = vmatmul.bf16.gmra.mxu0 %v87
    %v1802 = vpop.f32.mrf.mxu0
    %v1803 = vadd.f32 %v1790, %v1802
    %v1804 = vpop.f32.mrf.mxu0
    %1805 = vdwg.mxu0
    %v1806 = vmax.f32 %v1530, 0.0
    %v1807 = vmax.f32 %v1621, 0.0
    %v1808 = vmax.f32 %v1712, 0.0
    %v1809 = vmax.f32 %v1803, 0.0
    %v1810 = vpack.c.bf16 %v1806, %v1806
    %v1811 = vpack.c.bf16 %v1807, %v1807
    %v1812 = vpack.c.bf16 %v1808, %v1808
    %v1813 = vpack.c.bf16 %v1809, %v1809
    %v1814 = vld [vmem:[#allocation5] sm:$0xff]
    %v1815 = vld [vmem:[#allocation5 + $0x8] sm:$0xff]
    %v1816 = vld [vmem:[#allocation5 + $0x10] sm:$0xff]
    %v1817 = vld [vmem:[#allocation5 + $0x18] sm:$0xff]
    %v1818 = vld [vmem:[#allocation5 + $0x20] sm:$0xff]
    %v1819 = vld [vmem:[#allocation5 + $0x28] sm:$0xff]
    %v1820 = vld [vmem:[#allocation5 + $0x30] sm:$0xff]
    %v1821 = vld [vmem:[#allocation5 + $0x38] sm:$0xff]
    %v1822 = vld [vmem:[#allocation5 + $0x40] sm:$0xff]
    %v1823 = vld [vmem:[#allocation5 + $0x48] sm:$0xff]
    %v1824 = vld [vmem:[#allocation5 + $0x50] sm:$0xff]
    %v1825 = vld [vmem:[#allocation5 + $0x58] sm:$0xff]
    %v1826 = vld [vmem:[#allocation5 + $0x60] sm:$0xff]
    %v1827 = vld [vmem:[#allocation5 + $0x68] sm:$0xff]
    %v1828 = vld [vmem:[#allocation5 + $0x70] sm:$0xff]
    %v1829 = vld [vmem:[#allocation5 + $0x78] sm:$0xff]
    %v1830 = vld [vmem:[#allocation5 + $0x80] sm:$0xff]
    %v1831 = vld [vmem:[#allocation5 + $0x88] sm:$0xff]
    %v1832 = vld [vmem:[#allocation5 + $0x90] sm:$0xff]
    %v1833 = vld [vmem:[#allocation5 + $0x98] sm:$0xff]
    %v1834 = vld [vmem:[#allocation5 + $0xa0] sm:$0xff]
    %v1835 = vld [vmem:[#allocation5 + $0xa8] sm:$0xff]
    %v1836 = vld [vmem:[#allocation5 + $0xb0] sm:$0xff]
    %v1837 = vld [vmem:[#allocation5 + $0xb8] sm:$0xff]
    %v1838 = vld [vmem:[#allocation5 + $0xc0] sm:$0xff]
    %v1839 = vld [vmem:[#allocation5 + $0xc8] sm:$0xff]
    %v1840 = vld [vmem:[#allocation5 + $0xd0] sm:$0xff]
    %v1841 = vld [vmem:[#allocation5 + $0xd8] sm:$0xff]
    %v1842 = vld [vmem:[#allocation5 + $0xe0] sm:$0xff]
    %v1843 = vld [vmem:[#allocation5 + $0xe8] sm:$0xff]
    %v1844 = vld [vmem:[#allocation5 + $0xf0] sm:$0xff]
    %v1845 = vld [vmem:[#allocation5 + $0xf8] sm:$0xff]
    %v1846 = vld [vmem:[#allocation5 + $0x100] sm:$0xff]
    %v1847 = vld [vmem:[#allocation5 + $0x108] sm:$0xff]
    %v1848 = vld [vmem:[#allocation5 + $0x110] sm:$0xff]
    %v1849 = vld [vmem:[#allocation5 + $0x118] sm:$0xff]
    %v1850 = vld [vmem:[#allocation5 + $0x120] sm:$0xff]
    %v1851 = vld [vmem:[#allocation5 + $0x128] sm:$0xff]
    %v1852 = vld [vmem:[#allocation5 + $0x130] sm:$0xff]
    %v1853 = vld [vmem:[#allocation5 + $0x138] sm:$0xff]
    %v1854 = vld [vmem:[#allocation5 + $0x140] sm:$0xff]
    %v1855 = vld [vmem:[#allocation5 + $0x148] sm:$0xff]
    %v1856 = vld [vmem:[#allocation5 + $0x150] sm:$0xff]
    %v1857 = vld [vmem:[#allocation5 + $0x158] sm:$0xff]
    %v1858 = vld [vmem:[#allocation5 + $0x160] sm:$0xff]
    %v1859 = vld [vmem:[#allocation5 + $0x168] sm:$0xff]
    %v1860 = vld [vmem:[#allocation5 + $0x170] sm:$0xff]
    %v1861 = vld [vmem:[#allocation5 + $0x178] sm:$0xff]
    %v1862 = vld [vmem:[#allocation5 + $0x180] sm:$0xff]
    %v1863 = vld [vmem:[#allocation5 + $0x188] sm:$0xff]
    %v1864 = vld [vmem:[#allocation5 + $0x190] sm:$0xff]
    %v1865 = vld [vmem:[#allocation5 + $0x198] sm:$0xff]
    %v1866 = vld [vmem:[#allocation5 + $0x1a0] sm:$0xff]
    %v1867 = vld [vmem:[#allocation5 + $0x1a8] sm:$0xff]
    %v1868 = vld [vmem:[#allocation5 + $0x1b0] sm:$0xff]
    %v1869 = vld [vmem:[#allocation5 + $0x1b8] sm:$0xff]
    %v1870 = vld [vmem:[#allocation5 + $0x1c0] sm:$0xff]
    %v1871 = vld [vmem:[#allocation5 + $0x1c8] sm:$0xff]
    %v1872 = vld [vmem:[#allocation5 + $0x1d0] sm:$0xff]
    %v1873 = vld [vmem:[#allocation5 + $0x1d8] sm:$0xff]
    %v1874 = vld [vmem:[#allocation5 + $0x1e0] sm:$0xff]
    %v1875 = vld [vmem:[#allocation5 + $0x1e8] sm:$0xff]
    %v1876 = vld [vmem:[#allocation5 + $0x1f0] sm:$0xff]
    %v1877 = vld [vmem:[#allocation5 + $0x1f8] sm:$0xff]
    %v1878 = vld [vmem:[%s4] sm:$0x3]
    %v1880 = vperm.slane %v1878, 0
    %v1881 = vperm.slane %v1878, 1
    %v1948 = vunpack.c.l.b16 %v1814
    %v1949 = vunpack.c.h.b16 %v1814
    %v1950 = vunpack.c.l.b16 %v1815
    %v1951 = vunpack.c.h.b16 %v1815
    %v1952 = vunpack.c.l.b16 %v1816
    %v1953 = vunpack.c.h.b16 %v1816
    %v1954 = vunpack.c.l.b16 %v1817
    %v1955 = vunpack.c.h.b16 %v1817
    %v1956 = vunpack.c.l.b16 %v1818
    %v1957 = vunpack.c.h.b16 %v1818
    %v1958 = vunpack.c.l.b16 %v1819
    %v1959 = vunpack.c.h.b16 %v1819
    %v1960 = vunpack.c.l.b16 %v1820
    %v1961 = vunpack.c.h.b16 %v1820
    %v1962 = vunpack.c.l.b16 %v1821
    %v1963 = vunpack.c.h.b16 %v1821
    %v1964 = vunpack.c.l.b16 %v1822
    %v1965 = vunpack.c.h.b16 %v1822
    %v1966 = vunpack.c.l.b16 %v1823
    %v1967 = vunpack.c.h.b16 %v1823
    %v1968 = vunpack.c.l.b16 %v1824
    %v1969 = vunpack.c.h.b16 %v1824
    %v1970 = vunpack.c.l.b16 %v1825
    %v1971 = vunpack.c.h.b16 %v1825
    %v1972 = vunpack.c.l.b16 %v1826
    %v1973 = vunpack.c.h.b16 %v1826
    %v1974 = vunpack.c.l.b16 %v1827
    %v1975 = vunpack.c.h.b16 %v1827
    %v1976 = vunpack.c.l.b16 %v1828
    %v1977 = vunpack.c.h.b16 %v1828
    %v1978 = vunpack.c.l.b16 %v1829
    %v1979 = vunpack.c.h.b16 %v1829
    %v1980 = vunpack.c.l.b16 %v1830
    %v1981 = vunpack.c.h.b16 %v1830
    %v1982 = vunpack.c.l.b16 %v1831
    %v1983 = vunpack.c.h.b16 %v1831
    %v1984 = vunpack.c.l.b16 %v1832
    %v1985 = vunpack.c.h.b16 %v1832
    %v1986 = vunpack.c.l.b16 %v1833
    %v1987 = vunpack.c.h.b16 %v1833
    %v1988 = vunpack.c.l.b16 %v1834
    %v1989 = vunpack.c.h.b16 %v1834
    %v1990 = vunpack.c.l.b16 %v1835
    %v1991 = vunpack.c.h.b16 %v1835
    %v1992 = vunpack.c.l.b16 %v1836
    %v1993 = vunpack.c.h.b16 %v1836
    %v1994 = vunpack.c.l.b16 %v1837
    %v1995 = vunpack.c.h.b16 %v1837
    %v1996 = vunpack.c.l.b16 %v1838
    %v1997 = vunpack.c.h.b16 %v1838
    %v1998 = vunpack.c.l.b16 %v1839
    %v1999 = vunpack.c.h.b16 %v1839
    %v2000 = vunpack.c.l.b16 %v1840
    %v2001 = vunpack.c.h.b16 %v1840
    %v2002 = vunpack.c.l.b16 %v1841
    %v2003 = vunpack.c.h.b16 %v1841
    %v2004 = vunpack.c.l.b16 %v1842
    %v2005 = vunpack.c.h.b16 %v1842
    %v2006 = vunpack.c.l.b16 %v1843
    %v2007 = vunpack.c.h.b16 %v1843
    %v2008 = vunpack.c.l.b16 %v1844
    %v2009 = vunpack.c.h.b16 %v1844
    %v2010 = vunpack.c.l.b16 %v1845
    %v2011 = vunpack.c.h.b16 %v1845
    %v2012 = vunpack.c.l.b16 %v1846
    %v2013 = vunpack.c.h.b16 %v1846
    %v2014 = vunpack.c.l.b16 %v1847
    %v2015 = vunpack.c.h.b16 %v1847
    %v2016 = vunpack.c.l.b16 %v1848
    %v2017 = vunpack.c.h.b16 %v1848
    %v2018 = vunpack.c.l.b16 %v1849
    %v2019 = vunpack.c.h.b16 %v1849
    %v2020 = vunpack.c.l.b16 %v1850
    %v2021 = vunpack.c.h.b16 %v1850
    %v2022 = vunpack.c.l.b16 %v1851
    %v2023 = vunpack.c.h.b16 %v1851
    %v2024 = vunpack.c.l.b16 %v1852
    %v2025 = vunpack.c.h.b16 %v1852
    %v2026 = vunpack.c.l.b16 %v1853
    %v2027 = vunpack.c.h.b16 %v1853
    %v2028 = vunpack.c.l.b16 %v1854
    %v2029 = vunpack.c.h.b16 %v1854
    %v2030 = vunpack.c.l.b16 %v1855
    %v2031 = vunpack.c.h.b16 %v1855
    %v2032 = vunpack.c.l.b16 %v1856
    %v2033 = vunpack.c.h.b16 %v1856
    %v2034 = vunpack.c.l.b16 %v1857
    %v2035 = vunpack.c.h.b16 %v1857
    %v2036 = vunpack.c.l.b16 %v1858
    %v2037 = vunpack.c.h.b16 %v1858
    %v2038 = vunpack.c.l.b16 %v1859
    %v2039 = vunpack.c.h.b16 %v1859
    %v2040 = vunpack.c.l.b16 %v1860
    %v2041 = vunpack.c.h.b16 %v1860
    %v2042 = vunpack.c.l.b16 %v1861
    %v2043 = vunpack.c.h.b16 %v1861
    %v2044 = vunpack.c.l.b16 %v1862
    %v2045 = vunpack.c.h.b16 %v1862
    %v2046 = vunpack.c.l.b16 %v1863
    %v2047 = vunpack.c.h.b16 %v1863
    %v2048 = vunpack.c.l.b16 %v1864
    %v2049 = vunpack.c.h.b16 %v1864
    %v2050 = vunpack.c.l.b16 %v1865
    %v2051 = vunpack.c.h.b16 %v1865
    %v2052 = vunpack.c.l.b16 %v1866
    %v2053 = vunpack.c.h.b16 %v1866
    %v2054 = vunpack.c.l.b16 %v1867
    %v2055 = vunpack.c.h.b16 %v1867
    %v2056 = vunpack.c.l.b16 %v1868
    %v2057 = vunpack.c.h.b16 %v1868
    %v2058 = vunpack.c.l.b16 %v1869
    %v2059 = vunpack.c.h.b16 %v1869
    %v2060 = vunpack.c.l.b16 %v1870
    %v2061 = vunpack.c.h.b16 %v1870
    %v2062 = vunpack.c.l.b16 %v1871
    %v2063 = vunpack.c.h.b16 %v1871
    %v2064 = vunpack.c.l.b16 %v1872
    %v2065 = vunpack.c.h.b16 %v1872
    %v2066 = vunpack.c.l.b16 %v1873
    %v2067 = vunpack.c.h.b16 %v1873
    %v2068 = vunpack.c.l.b16 %v1874
    %v2069 = vunpack.c.h.b16 %v1874
    %v2070 = vunpack.c.l.b16 %v1875
    %v2071 = vunpack.c.h.b16 %v1875
    %v2072 = vunpack.c.l.b16 %v1876
    %v2073 = vunpack.c.h.b16 %v1876
    %v2074 = vunpack.c.l.b16 %v1877
    %v2075 = vunpack.c.h.b16 %v1877
    %v2076 = vpack.c.b16 %v1950, %v1948
    %v2077 = vpack.c.b16 %v1951, %v1949
    %v2078 = vpack.c.b16 %v1954, %v1952
    %v2079 = vpack.c.b16 %v1955, %v1953
    %v2080 = vpack.c.b16 %v1958, %v1956
    %v2081 = vpack.c.b16 %v1959, %v1957
    %v2082 = vpack.c.b16 %v1962, %v1960
    %v2083 = vpack.c.b16 %v1963, %v1961
    %v2084 = vpack.c.b16 %v1966, %v1964
    %v2085 = vpack.c.b16 %v1967, %v1965
    %v2086 = vpack.c.b16 %v1970, %v1968
    %v2087 = vpack.c.b16 %v1971, %v1969
    %v2088 = vpack.c.b16 %v1974, %v1972
    %v2089 = vpack.c.b16 %v1975, %v1973
    %v2090 = vpack.c.b16 %v1978, %v1976
    %v2091 = vpack.c.b16 %v1979, %v1977
    %v2092 = vpack.c.b16 %v1982, %v1980
    %v2093 = vpack.c.b16 %v1983, %v1981
    %v2094 = vpack.c.b16 %v1986, %v1984
    %v2095 = vpack.c.b16 %v1987, %v1985
    %v2096 = vpack.c.b16 %v1990, %v1988
    %v2097 = vpack.c.b16 %v1991, %v1989
    %v2098 = vpack.c.b16 %v1994, %v1992
    %v2099 = vpack.c.b16 %v1995, %v1993
    %v2100 = vpack.c.b16 %v1998, %v1996
    %v2101 = vpack.c.b16 %v1999, %v1997
    %v2102 = vpack.c.b16 %v2002, %v2000
    %v2103 = vpack.c.b16 %v2003, %v2001
    %v2104 = vpack.c.b16 %v2006, %v2004
    %v2105 = vpack.c.b16 %v2007, %v2005
    %v2106 = vpack.c.b16 %v2010, %v2008
    %v2107 = vpack.c.b16 %v2011, %v2009
    %v2108 = vpack.c.b16 %v2014, %v2012
    %v2109 = vpack.c.b16 %v2015, %v2013
    %v2110 = vpack.c.b16 %v2018, %v2016
    %v2111 = vpack.c.b16 %v2019, %v2017
    %v2112 = vpack.c.b16 %v2022, %v2020
    %v2113 = vpack.c.b16 %v2023, %v2021
    %v2114 = vpack.c.b16 %v2026, %v2024
    %v2115 = vpack.c.b16 %v2027, %v2025
    %v2116 = vpack.c.b16 %v2030, %v2028
    %v2117 = vpack.c.b16 %v2031, %v2029
    %v2118 = vpack.c.b16 %v2034, %v2032
    %v2119 = vpack.c.b16 %v2035, %v2033
    %v2120 = vpack.c.b16 %v2038, %v2036
    %v2121 = vpack.c.b16 %v2039, %v2037
    %v2122 = vpack.c.b16 %v2042, %v2040
    %v2123 = vpack.c.b16 %v2043, %v2041
    %v2124 = vpack.c.b16 %v2046, %v2044
    %v2125 = vpack.c.b16 %v2047, %v2045
    %v2126 = vpack.c.b16 %v2050, %v2048
    %v2127 = vpack.c.b16 %v2051, %v2049
    %v2128 = vpack.c.b16 %v2054, %v2052
    %v2129 = vpack.c.b16 %v2055, %v2053
    %v2130 = vpack.c.b16 %v2058, %v2056
    %v2131 = vpack.c.b16 %v2059, %v2057
    %v2132 = vpack.c.b16 %v2062, %v2060
    %v2133 = vpack.c.b16 %v2063, %v2061
    %v2134 = vpack.c.b16 %v2066, %v2064
    %v2135 = vpack.c.b16 %v2067, %v2065
    %v2136 = vpack.c.b16 %v2070, %v2068
    %v2137 = vpack.c.b16 %v2071, %v2069
    %v2138 = vpack.c.b16 %v2074, %v2072
    %v2139 = vpack.c.b16 %v2075, %v2073
    %2204 = vmatpush.bf16.msra.mxu0 %v2090
    %2205 = vmatpush.bf16.msra.mxu0 %v2088
    %2206 = vmatpush.bf16.msra.mxu0 %v2086
    %2207 = vmatpush.bf16.msra.mxu0 %v2084
    %2208 = vmatpush.bf16.msra.mxu0 %v2082
    %2209 = vmatpush.bf16.msra.mxu0 %v2080
    %2210 = vmatpush.bf16.msra.mxu0 %v2078
    %2211 = vmatpush.bf16.msra.mxu0 %v2076
    %2212 = vmatmul.bf16.gmra.mxu0 %v1810
    %v2213 = vpop.f32.mrf.mxu0
    %v2214 = vadd.f32 %v1880, %v2213
    %v2215 = vpop.f32.mrf.mxu0
    %2216 = vdwg.mxu0
    %2217 = vmatpush.bf16.msra.mxu0 %v2106
    %2218 = vmatpush.bf16.msra.mxu0 %v2104
    %2219 = vmatpush.bf16.msra.mxu0 %v2102
    %2220 = vmatpush.bf16.msra.mxu0 %v2100
    %2221 = vmatpush.bf16.msra.mxu0 %v2098
    %2222 = vmatpush.bf16.msra.mxu0 %v2096
    %2223 = vmatpush.bf16.msra.mxu0 %v2094
    %2224 = vmatpush.bf16.msra.mxu0 %v2092
    %2225 = vmatmul.bf16.gmra.mxu0 %v1811
    %v2226 = vpop.f32.mrf.mxu0
    %v2227 = vadd.f32 %v2214, %v2226
    %v2228 = vpop.f32.mrf.mxu0
    %2229 = vdwg.mxu0
    %2230 = vmatpush.bf16.msra.mxu0 %v2122
    %2231 = vmatpush.bf16.msra.mxu0 %v2120
    %2232 = vmatpush.bf16.msra.mxu0 %v2118
    %2233 = vmatpush.bf16.msra.mxu0 %v2116
    %2234 = vmatpush.bf16.msra.mxu0 %v2114
    %2235 = vmatpush.bf16.msra.mxu0 %v2112
    %2236 = vmatpush.bf16.msra.mxu0 %v2110
    %2237 = vmatpush.bf16.msra.mxu0 %v2108
    %2238 = vmatmul.bf16.gmra.mxu0 %v1812
    %v2239 = vpop.f32.mrf.mxu0
    %v2240 = vadd.f32 %v2227, %v2239
    %v2241 = vpop.f32.mrf.mxu0
    %2242 = vdwg.mxu0
    %2243 = vmatpush.bf16.msra.mxu0 %v2138
    %2244 = vmatpush.bf16.msra.mxu0 %v2136
    %2245 = vmatpush.bf16.msra.mxu0 %v2134
    %2246 = vmatpush.bf16.msra.mxu0 %v2132
    %2247 = vmatpush.bf16.msra.mxu0 %v2130
    %2248 = vmatpush.bf16.msra.mxu0 %v2128
    %2249 = vmatpush.bf16.msra.mxu0 %v2126
    %2250 = vmatpush.bf16.msra.mxu0 %v2124
    %2251 = vmatmul.bf16.gmra.mxu0 %v1813
    %v2252 = vpop.f32.mrf.mxu0
    %v2253 = vadd.f32 %v2240, %v2252
    %v2254 = vpop.f32.mrf.mxu0
    %2255 = vdwg.mxu0
    %2256 = vmatpush.bf16.msra.mxu0 %v2091
    %2257 = vmatpush.bf16.msra.mxu0 %v2089
    %2258 = vmatpush.bf16.msra.mxu0 %v2087
    %2259 = vmatpush.bf16.msra.mxu0 %v2085
    %2260 = vmatpush.bf16.msra.mxu0 %v2083
    %2261 = vmatpush.bf16.msra.mxu0 %v2081
    %2262 = vmatpush.bf16.msra.mxu0 %v2079
    %2263 = vmatpush.bf16.msra.mxu0 %v2077
    %2264 = vmatmul.bf16.gmra.mxu0 %v1810
    %v2265 = vpop.f32.mrf.mxu0
    %v2266 = vadd.f32 %v1881, %v2265
    %v2267 = vpop.f32.mrf.mxu0
    %2268 = vdwg.mxu0
    %2269 = vmatpush.bf16.msra.mxu0 %v2107
    %2270 = vmatpush.bf16.msra.mxu0 %v2105
    %2271 = vmatpush.bf16.msra.mxu0 %v2103
    %2272 = vmatpush.bf16.msra.mxu0 %v2101
    %2273 = vmatpush.bf16.msra.mxu0 %v2099
    %2274 = vmatpush.bf16.msra.mxu0 %v2097
    %2275 = vmatpush.bf16.msra.mxu0 %v2095
    %2276 = vmatpush.bf16.msra.mxu0 %v2093
    %2277 = vmatmul.bf16.gmra.mxu0 %v1811
    %v2278 = vpop.f32.mrf.mxu0
    %v2279 = vadd.f32 %v2266, %v2278
    %v2280 = vpop.f32.mrf.mxu0
    %2281 = vdwg.mxu0
    %2282 = vmatpush.bf16.msra.mxu0 %v2123
    %2283 = vmatpush.bf16.msra.mxu0 %v2121
    %2284 = vmatpush.bf16.msra.mxu0 %v2119
    %2285 = vmatpush.bf16.msra.mxu0 %v2117
    %2286 = vmatpush.bf16.msra.mxu0 %v2115
    %2287 = vmatpush.bf16.msra.mxu0 %v2113
    %2288 = vmatpush.bf16.msra.mxu0 %v2111
    %2289 = vmatpush.bf16.msra.mxu0 %v2109
    %2290 = vmatmul.bf16.gmra.mxu0 %v1812
    %v2291 = vpop.f32.mrf.mxu0
    %v2292 = vadd.f32 %v2279, %v2291
    %v2293 = vpop.f32.mrf.mxu0
    %2294 = vdwg.mxu0
    %2295 = vmatpush.bf16.msra.mxu0 %v2139
    %2296 = vmatpush.bf16.msra.mxu0 %v2137
    %2297 = vmatpush.bf16.msra.mxu0 %v2135
    %2298 = vmatpush.bf16.msra.mxu0 %v2133
    %2299 = vmatpush.bf16.msra.mxu0 %v2131
    %2300 = vmatpush.bf16.msra.mxu0 %v2129
    %2301 = vmatpush.bf16.msra.mxu0 %v2127
    %2302 = vmatpush.bf16.msra.mxu0 %v2125
    %2303 = vmatmul.bf16.gmra.mxu0 %v1813
    %v2304 = vpop.f32.mrf.mxu0
    %v2305 = vadd.f32 %v2292, %v2304
    %v2306 = vpop.f32.mrf.mxu0
    %2307 = vdwg.mxu0
    %v2308 = vmax.f32 %v2253, 0.0
    %v2309 = vmax.f32 %v2305, 0.0
    %v2310 = vpack.c.bf16 %v2308, %v2308
    %v2311 = vpack.c.bf16 %v2309, %v2309
    %v2312 = vld [vmem:[#allocation7] sm:$0xf]
    %v2313 = vld [vmem:[#allocation7 + $0x4] sm:$0xf]
    %v2314 = vld [vmem:[#allocation7 + $0x8] sm:$0xf]
    %v2315 = vld [vmem:[#allocation7 + $0xc] sm:$0xf]
    %v2316 = vld [vmem:[#allocation7 + $0x10] sm:$0xf]
    %v2317 = vld [vmem:[#allocation7 + $0x14] sm:$0xf]
    %v2318 = vld [vmem:[#allocation7 + $0x18] sm:$0xf]
    %v2319 = vld [vmem:[#allocation7 + $0x1c] sm:$0xf]
    %v2320 = vld [vmem:[#allocation7 + $0x20] sm:$0xf]
    %v2321 = vld [vmem:[#allocation7 + $0x24] sm:$0xf]
    %v2322 = vld [vmem:[#allocation7 + $0x28] sm:$0xf]
    %v2323 = vld [vmem:[#allocation7 + $0x2c] sm:$0xf]
    %v2324 = vld [vmem:[#allocation7 + $0x30] sm:$0xf]
    %v2325 = vld [vmem:[#allocation7 + $0x34] sm:$0xf]
    %v2326 = vld [vmem:[#allocation7 + $0x38] sm:$0xf]
    %v2327 = vld [vmem:[#allocation7 + $0x3c] sm:$0xf]
    %v2328 = vld [vmem:[#allocation7 + $0x40] sm:$0xf]
    %v2329 = vld [vmem:[#allocation7 + $0x44] sm:$0xf]
    %v2330 = vld [vmem:[#allocation7 + $0x48] sm:$0xf]
    %v2331 = vld [vmem:[#allocation7 + $0x4c] sm:$0xf]
    %v2332 = vld [vmem:[#allocation7 + $0x50] sm:$0xf]
    %v2333 = vld [vmem:[#allocation7 + $0x54] sm:$0xf]
    %v2334 = vld [vmem:[#allocation7 + $0x58] sm:$0xf]
    %v2335 = vld [vmem:[#allocation7 + $0x5c] sm:$0xf]
    %v2336 = vld [vmem:[#allocation7 + $0x60] sm:$0xf]
    %v2337 = vld [vmem:[#allocation7 + $0x64] sm:$0xf]
    %v2338 = vld [vmem:[#allocation7 + $0x68] sm:$0xf]
    %v2339 = vld [vmem:[#allocation7 + $0x6c] sm:$0xf]
    %v2340 = vld [vmem:[#allocation7 + $0x70] sm:$0xf]
    %v2341 = vld [vmem:[#allocation7 + $0x74] sm:$0xf]
    %v2342 = vld [vmem:[#allocation7 + $0x78] sm:$0xf]
    %v2343 = vld [vmem:[#allocation7 + $0x7c] sm:$0xf]
    %v2344 = vld [vmem:[%s6] sm:$0x1]
    %v2346 = vperm.slane %v2344, 0
    %v2380 = vunpack.c.l.b16 %v2312
    %v2381 = vunpack.c.l.b16 %v2313
    %v2382 = vunpack.c.l.b16 %v2314
    %v2383 = vunpack.c.l.b16 %v2315
    %v2384 = vunpack.c.l.b16 %v2316
    %v2385 = vunpack.c.l.b16 %v2317
    %v2386 = vunpack.c.l.b16 %v2318
    %v2387 = vunpack.c.l.b16 %v2319
    %v2388 = vunpack.c.l.b16 %v2320
    %v2389 = vunpack.c.l.b16 %v2321
    %v2390 = vunpack.c.l.b16 %v2322
    %v2391 = vunpack.c.l.b16 %v2323
    %v2392 = vunpack.c.l.b16 %v2324
    %v2393 = vunpack.c.l.b16 %v2325
    %v2394 = vunpack.c.l.b16 %v2326
    %v2395 = vunpack.c.l.b16 %v2327
    %v2396 = vunpack.c.l.b16 %v2328
    %v2397 = vunpack.c.l.b16 %v2329
    %v2398 = vunpack.c.l.b16 %v2330
    %v2399 = vunpack.c.l.b16 %v2331
    %v2400 = vunpack.c.l.b16 %v2332
    %v2401 = vunpack.c.l.b16 %v2333
    %v2402 = vunpack.c.l.b16 %v2334
    %v2403 = vunpack.c.l.b16 %v2335
    %v2404 = vunpack.c.l.b16 %v2336
    %v2405 = vunpack.c.l.b16 %v2337
    %v2406 = vunpack.c.l.b16 %v2338
    %v2407 = vunpack.c.l.b16 %v2339
    %v2408 = vunpack.c.l.b16 %v2340
    %v2409 = vunpack.c.l.b16 %v2341
    %v2410 = vunpack.c.l.b16 %v2342
    %v2411 = vunpack.c.l.b16 %v2343
    %v2412 = vpack.c.b16 %v2381, %v2380
    %v2413 = vpack.c.b16 %v2383, %v2382
    %v2414 = vpack.c.b16 %v2385, %v2384
    %v2415 = vpack.c.b16 %v2387, %v2386
    %v2416 = vpack.c.b16 %v2389, %v2388
    %v2417 = vpack.c.b16 %v2391, %v2390
    %v2418 = vpack.c.b16 %v2393, %v2392
    %v2419 = vpack.c.b16 %v2395, %v2394
    %v2420 = vpack.c.b16 %v2397, %v2396
    %v2421 = vpack.c.b16 %v2399, %v2398
    %v2422 = vpack.c.b16 %v2401, %v2400
    %v2423 = vpack.c.b16 %v2403, %v2402
    %v2424 = vpack.c.b16 %v2405, %v2404
    %v2425 = vpack.c.b16 %v2407, %v2406
    %v2426 = vpack.c.b16 %v2409, %v2408
    %v2427 = vpack.c.b16 %v2411, %v2410
    %2444 = vmatpush.bf16.msra.mxu0 %v2419
    %2445 = vmatpush.bf16.msra.mxu0 %v2418
    %2446 = vmatpush.bf16.msra.mxu0 %v2417
    %2447 = vmatpush.bf16.msra.mxu0 %v2416
    %2448 = vmatpush.bf16.msra.mxu0 %v2415
    %2449 = vmatpush.bf16.msra.mxu0 %v2414
    %2450 = vmatpush.bf16.msra.mxu0 %v2413
    %2451 = vmatpush.bf16.msra.mxu0 %v2412
    %2452 = vmatmul.bf16.gmra.mxu0 %v2310
    %v2453 = vpop.f32.mrf.mxu0
    %v2454 = vadd.f32 %v2346, %v2453
    %v2455 = vpop.f32.mrf.mxu0
    %2456 = vdwg.mxu0
    %2457 = vmatpush.bf16.msra.mxu0 %v2427
    %2458 = vmatpush.bf16.msra.mxu0 %v2426
    %2459 = vmatpush.bf16.msra.mxu0 %v2425
    %2460 = vmatpush.bf16.msra.mxu0 %v2424
    %2461 = vmatpush.bf16.msra.mxu0 %v2423
    %2462 = vmatpush.bf16.msra.mxu0 %v2422
    %2463 = vmatpush.bf16.msra.mxu0 %v2421
    %2464 = vmatpush.bf16.msra.mxu0 %v2420
    %2465 = vmatmul.bf16.gmra.mxu0 %v2311
    %v2466 = vpop.f32.mrf.mxu0
    %v2467 = vadd.f32 %v2454, %v2466
    %v2468 = vpop.f32.mrf.mxu0
    %2469 = vdwg.mxu0
    %v2470 = vmax.f32 %v2467, 0.0
    %2471 = vst [vmem:[#allocation8] sm:$0xff] %v2470
    // Predicated region
    $region42: #{simplefc_forward.1} parent=1 // pred_check
      _
    $region43: #{simplefc_forward.1} parent=1 // pred_check_branch
      %2473 = sbr.rel (0) target = $region45
    $region44: #{simplefc_forward.1} parent=1 // pred_region
      %2475 = vsyncadd [#allocation4], 0
      %s2477 = sshll.u32 [#allocation8], 4
      %s2478 = int_to_ptr.vmem [resolvable:$true] %s2477
      %s2479 = sshll.u32 %s7, 4
      %s2480 = int_to_ptr.hbm [resolvable:$true] %s2479
      %2482 = dma.vmem_to_hbm [thread:$0]  %s2478, 128, %s2480, [#allocation4]
    $region45: #{simplefc_forward.1} parent=1 // pred_fallthru
      _
    // Predicated region
    $region46: #{simplefc_forward.1} parent=1 // pred_check
      _
    $region47: #{simplefc_forward.1} parent=1 // pred_check_branch
      %2484 = sbr.rel (0) target = $region49
    $region48: #{simplefc_forward.1} parent=1 // pred_region
      %2486 = dma.done [#allocation4], 128
    $region49: #{simplefc_forward.1} parent=1 // pred_fallthru
      _
    %2487 = vsyncpa [#allocation3], 1
    %2488 = vsyncpa [#allocation6], 1
    %2489 = vsyncpa [#allocation4], 1

</llo_original>
